<compile_context>
chip_gen: v6e
topology: v6e:2x2x1
jax: 0.10.0
libtpu: 0.0.40
codegen_flags: <defaults>
</compile_context>

<pallas_src>
import functools

import jax
import jax.numpy as jnp
from jax import lax
from jax.experimental import pallas as pl
from jax.experimental.pallas import tpu as pltpu


def _round_up(x, m):
    return ((x + m - 1) // m) * m


# ----------------------------------------------------------------------------
# Fused BasicBlock kernel (one grid step == one batch image)
# ----------------------------------------------------------------------------
def _make_block_kernel(s, H1, W1, KC, planes, Cp, noff, has_down):
    M1 = H1 * W1
    od = 1 // s                        # conv1 window offset holding the shortcut tap

    def body(x_ref, w1_ref, w2_ref, wd_ref, bns_ref, bnb_ref, o_ref, o1_ref):
        # ---- conv1 + bn1 + relu ---------------------------------------------
        # x_ref is phase-packed NHWC (channel = (py*s+px)*Ck + c), so the nine
        # 3x3 taps collapse into noff**2 shifted-window matmuls of depth KC.
        acc1 = jnp.zeros((M1, Cp), jnp.float32)
        win_cache = {}
        for oy in range(noff):
            for ox in range(noff):
                win = x_ref[oy:oy + H1, ox:ox + W1, :].reshape(M1, KC)
                win_cache[(oy, ox)] = win
                acc1 = acc1 + jnp.dot(win, w1_ref[oy * noff + ox],
                                      preferred_element_type=jnp.float32)
        out1 = jnp.maximum(acc1 * bns_ref[0:1, :] + bnb_ref[0:1, :], 0.0)

        # ---- stage out1 into a zero-halo scratch ------------------------------
        # Only the halo perimeter is cleared each step (interior is fully
        # rewritten every step); safe under megacore "parallel" batch splits.
        o1_ref[0:1, :, :] = jnp.zeros((1, W1 + 2, Cp), jnp.float32)
        o1_ref[H1 + 1:H1 + 2, :, :] = jnp.zeros((1, W1 + 2, Cp), jnp.float32)
        o1_ref[1:H1 + 1, 0:1, :] = jnp.zeros((H1, 1, Cp), jnp.float32)
        o1_ref[1:H1 + 1, W1 + 1:W1 + 2, :] = jnp.zeros((H1, 1, Cp), jnp.float32)
        o1_ref[1:H1 + 1, 1:W1 + 1, :] = out1.reshape(H1, W1, Cp)

        # ---- conv2 + bn2: 9 unmasked shifted-window matmuls (K = Cp) ----------
        acc2 = jnp.zeros((M1, Cp), jnp.float32)
        for dy in range(3):
            for dx in range(3):
                tap = o1_ref[dy:dy + H1, dx:dx + W1, :].reshape(M1, Cp)
                acc2 = acc2 + jnp.dot(tap.astype(jnp.bfloat16),
                                      w2_ref[dy * 3 + dx],
                                      preferred_element_type=jnp.float32)
        y = acc2 * bns_ref[1:2, :] + bnb_ref[1:2, :]

        # ---- residual ---------------------------------------------------------
        if has_down:
            # 1x1/stride-s conv + bn; reuses an already-loaded conv1 window.
            res = jnp.dot(win_cache[(od, od)], wd_ref[...],
                          preferred_element_type=jnp.float32)
            res = res * bns_ref[2:3, :] + bnb_ref[2:3, :]
        else:
            # Identity shortcut: direct add (channels pre-padded to Cp by the
            # wrapper); no matmul, no BN.
            # TODO(synk): identity residual passes through the bf16 input cast
            # rather than the full-f32 skip path of the PyTorch module.
            res = win_cache[(od, od)].astype(jnp.float32)

        # ---- residual add + relu; Cp multiple of 128 -> lane-dense bf16 store -
        o_ref[...] = jnp.maximum(y + res, 0.0).astype(o_ref.dtype)

    if has_down:
        def kernel(x_ref, w1_ref, w2_ref, wd_ref, bns_ref, bnb_ref, o_ref, o1):
            body(x_ref, w1_ref, w2_ref, wd_ref, bns_ref, bnb_ref, o_ref, o1)
    else:
        def kernel(x_ref, w1_ref, w2_ref, bns_ref, bnb_ref, o_ref, o1):
            body(x_ref, w1_ref, w2_ref, None, bns_ref, bnb_ref, o_ref, o1)
    return kernel


# ----------------------------------------------------------------------------
# Glue: BN folding
# ----------------------------------------------------------------------------
def _fold_bn(gamma, beta, mean, var, eps=1e-5):
    scale = gamma / jnp.sqrt(var + eps)
    return scale, beta - mean * scale


# ----------------------------------------------------------------------------
# BasicBlock forward (Pallas path)
# ----------------------------------------------------------------------------
def basic_block_forward_padded(x_nchw, params, in_planes, planes, stride):
    """Fused BasicBlock; returns padded-NHWC bf16 (N, H1, W1, Cp)."""
    N, Cin, H, W = x_nchw.shape
    s = stride
    H1 = (H - 1) // s + 1
    W1 = (W - 1) // s + 1
    M1 = H1 * W1
    Cp = _round_up(planes, 128)          # lane-dense output channels
    noff = (3 + s - 1) // s              # shifted windows per spatial dim
    has_down = (s != 1) or (in_planes != planes)
    Ck = Cin if has_down else Cp         # identity path: pad channels to Cp
    KC = s * s * Ck                      # conv1 matmul depth per window

    # NCHW -> NHWC, bf16, conv pad 1, then phase interleave (space-to-depth for
    # stride > 1): channel index = (py*s + px)*Ck + c.
    x = jnp.transpose(x_nchw, (0, 2, 3, 1)).astype(jnp.bfloat16)
    if not has_down:
        x = jnp.pad(x, ((0, 0), (0, 0), (0, 0), (0, Ck - Cin)))
    Hp, Wp = _round_up(H + 2, s), _round_up(W + 2, s)
    xp = jnp.pad(x, ((0, 0), (1, Hp - H - 1), (1, Wp - W - 1), (0, 0)))
    Hph, Wph = Hp // s, Wp // s
    xph = xp.reshape(N, Hph, s, Wph, s, Ck).transpose(0, 1, 3, 2, 4, 5)
    xph = xph.reshape(N, Hph, Wph, KC)

    # conv1 weights -> (noff*noff, KC, Cp): all phases of a tap merged into the
    # contraction dim; phantom taps (dy or dx > 2) stay zero.
    w1 = params["w1"]
    w1p = jnp.zeros((noff * noff, KC, Cp), jnp.float32)
    for oy in range(noff):
        for ox in range(noff):
            for py in range(s):
                for px in range(s):
                    dy, dx = oy * s + py, ox * s + px
                    if dy < 3 and dx < 3:
                        blk = (py * s + px) * Ck
                        w1p = w1p.at[oy * noff + ox, blk:blk + Cin, :planes].set(
                            jnp.transpose(w1[:, :, dy, dx]))
    w1p = w1p.astype(jnp.bfloat16)

    # conv2 weights -> (9, Cp, Cp): contraction AND output channels padded so
    # every conv2 access is lane-dense / unmasked.
    w2 = params["w2"]
    w2p = jnp.transpose(w2, (2, 3, 1, 0)).reshape(9, planes, planes)
    w2p = jnp.pad(w2p, ((0, 0), (0, Cp - planes), (0, Cp - planes)))
    w2p = w2p.astype(jnp.bfloat16)

    # Folded BN scale/bias rows: [bn1, bn2, bn_downsample].
    s1, b1 = _fold_bn(*params["bn1"])
    s2, b2 = _fold_bn(*params["bn2"])
    pad_c = lambda v: jnp.pad(v.astype(jnp.float32), (0, Cp - planes))
    if has_down:
        sd, bd = _fold_bn(*params["bnd"])
        wd = params["wd"]
        wdp = jnp.zeros((KC, Cp), jnp.float32)
        d_blk = ((1 % s) * s + (1 % s)) * Ck   # phase block of the shortcut tap
        wdp = wdp.at[d_blk:d_blk + Cin, :planes].set(jnp.transpose(wd[:, :, 0, 0]))
        wdp = wdp.astype(jnp.bfloat16)
    else:
        sd = jnp.zeros((planes,), jnp.float32)
        bd = jnp.zeros((planes,), jnp.float32)
    bns = jnp.stack([pad_c(s1), pad_c(s2), pad_c(sd)])    # (3, Cp)
    bnb = jnp.stack([pad_c(b1), pad_c(b2), pad_c(bd)])    # (3, Cp)

    kernel = _make_block_kernel(s, H1, W1, KC, planes, Cp, noff, has_down)

    in_specs = [
        pl.BlockSpec((None, Hph, Wph, KC), lambda n: (n, 0, 0, 0)),
        pl.BlockSpec((noff * noff, KC, Cp), lambda n: (0, 0, 0),
                     pipeline_mode=pl.Buffered(1)),
        pl.BlockSpec((9, Cp, Cp), lambda n: (0, 0, 0),
                     pipeline_mode=pl.Buffered(1)),
    ]
    args = [xph, w1p, w2p]
    if has_down:
        in_specs.append(pl.BlockSpec((KC, Cp), lambda n: (0, 0),
                                     pipeline_mode=pl.Buffered(1)))
        args.append(wdp)
    in_specs += [
        pl.BlockSpec((3, Cp), lambda n: (0, 0), pipeline_mode=pl.Buffered(1)),
        pl.BlockSpec((3, Cp), lambda n: (0, 0), pipeline_mode=pl.Buffered(1)),
    ]
    args += [bns, bnb]

    flops = 2 * N * M1 * (noff * noff * KC * Cp + 9 * Cp * Cp
                          + (KC * Cp if has_down else 0))
    bytes_accessed = (xph.size * 2 + w1p.size * 2 + w2p.size * 2
                      + (KC * Cp * 2 if has_down else 0)
                      + 2 * 3 * Cp * 4 + N * M1 * Cp * 2)

    out = pl.pallas_call(
        kernel,
        out_shape=jax.ShapeDtypeStruct((N, M1, Cp), jnp.bfloat16),
        grid=(N,),
        in_specs=in_specs,
        out_specs=pl.BlockSpec((None, M1, Cp), lambda n: (n, 0, 0)),
        scratch_shapes=[pltpu.VMEM((H1 + 2, W1 + 2, Cp), jnp.float32)],
        compiler_params=pltpu.CompilerParams(
            dimension_semantics=("parallel",),
            vmem_limit_bytes=32 * 1024 * 1024),
        cost_estimate=pl.CostEstimate(flops=flops, transcendentals=0,
                                      bytes_accessed=bytes_accessed),
    )(*args)
    return out.reshape(N, H1, W1, Cp)


def basic_block_forward(x_nchw, params, in_planes, planes, stride):
    # NCHW/f32 conversion only for API parity with the PyTorch module / the
    # reference check; when chaining blocks keep the padded-NHWC bf16 output.
    out = basic_block_forward_padded(x_nchw, params, in_planes, planes, stride)
    out = out[..., :planes].astype(jnp.float32)
    return jnp.transpose(out, (0, 3, 1, 2))


# ----------------------------------------------------------------------------
# Pure-JAX reference (for correctness check)
# ----------------------------------------------------------------------------
def reference_forward(x, params, in_planes, planes, stride, eps=1e-5):
    def conv(x, w, s, p):
        return lax.conv_general_dilated(
            x, w, (s, s), ((p, p), (p, p)),
            dimension_numbers=("NCHW", "OIHW", "NCHW"),
            precision=lax.Precision.HIGHEST)

    def bn(x, stats):
        gamma, beta, mean, var = stats
        sc = gamma / jnp.sqrt(var + eps)
        bi = beta - mean * sc
        return x * sc[None, :, None, None] + bi[None, :, None, None]

    out = jnp.maximum(bn(conv(x, params["w1"], stride, 1), params["bn1"]), 0.0)
    out = bn(conv(out, params["w2"], 1, 1), params["bn2"])
    if stride != 1 or in_planes != planes:
        res = bn(conv(x, params["wd"], stride, 0), params["bnd"])
    else:
        res = x
    return jnp.maximum(out + res, 0.0)


# ----------------------------------------------------------------------------
# Deterministic parameter init
# ----------------------------------------------------------------------------
def init_params(key, in_planes, planes, stride):
    ks = jax.random.split(key, 16)

    def conv_w(k, cout, cin, ksz):
        fan_in = cin * ksz * ksz
        bound = 1.0 / jnp.sqrt(fan_in)
        return jax.random.uniform(k, (cout, cin, ksz, ksz), jnp.float32,
                                  -bound, bound)

    def bn_stats(k, c):
        k1, k2, k3, k4 = jax.random.split(k, 4)
        gamma = jax.random.uniform(k1, (c,), jnp.float32, 0.5, 1.5)
        beta = 0.1 * jax.random.normal(k2, (c,), jnp.float32)
        mean = 0.1 * jax.random.normal(k3, (c,), jnp.float32)
        var = jax.random.uniform(k4, (c,), jnp.float32, 0.5, 1.5)
        return (gamma, beta, mean, var)

    params = {
        "w1": conv_w(ks[0], planes, in_planes, 3),
        "bn1": bn_stats(ks[1], planes),
        "w2": conv_w(ks[2], planes, planes, 3),
        "bn2": bn_stats(ks[3], planes),
    }
    if stride != 1 or in_planes != planes:
        params["wd"] = conv_w(ks[4], planes, in_planes, 1)
        params["bnd"] = bn_stats(ks[5], planes)
    return params


# ----------------------------------------------------------------------------
if __name__ == "__main__":
    # BasicBlock(lambda_s=..., w_bits=..., a_bits=..., in_planes=4, planes=8,
    #            stride=2, use_fp=True, activation_quant=True)
    in_planes, planes, stride = 4, 8, 2
    B, H, W = 2, 16, 16

    key = jax.random.PRNGKey(0)
    kx, kp = jax.random.split(key)
    x = jax.random.normal(kx, (B, in_planes, H, W), jnp.float32)
    params = init_params(kp, in_planes, planes, stride)

    fwd = jax.jit(functools.partial(basic_block_forward,
                                    in_planes=in_planes, planes=planes,
                                    stride=stride))
    out = jax.block_until_ready(fwd(x, params))

    ref = reference_forward(x, params, in_planes, planes, stride)
    if out.shape != (B, planes, H // stride, W // stride):
        raise AssertionError(f"bad shape: {out.shape}")
    # bf16 MXU operands / bf16 output vs f32 HIGHEST-precision reference.
    if not jnp.allclose(out, ref, rtol=3e-2, atol=3e-2):
        max_err = float(jnp.max(jnp.abs(out - ref)))
        raise AssertionError(f"mismatch: max_err={max_err}")

    print("KERNEL_OK")
</pallas_src>

<mosaic_0001>
module attributes {stable_mosaic.version = 11 : i64} {
  func.func @kernel(%arg0: i32, %arg1: memref<1x9x9x16xbf16, #tpu.memory_space<vmem>>, %arg2: memref<4x16x128xbf16, #tpu.memory_space<vmem>>, %arg3: memref<9x128x128xbf16, #tpu.memory_space<vmem>>, %arg4: memref<16x128xbf16, #tpu.memory_space<vmem>>, %arg5: memref<3x128xf32, #tpu.memory_space<vmem>>, %arg6: memref<3x128xf32, #tpu.memory_space<vmem>>, %arg7: memref<1x64x128xbf16, #tpu.memory_space<vmem>>, %arg8: memref<10x10x128xf32, #tpu.memory_space<vmem>>) attributes {dimension_semantics = [#tpu.dimension_semantics<parallel>], iteration_bounds = array<i64: 2>, scalar_prefetch = 0 : i64, scratch_operands = 1 : i64, tpu.core_type = #tpu.core_type<tc>, window_params = [{transform_indices = @transform_0, window_bounds = array<i64: 1, 9, 9, 16>}, {pipeline_mode = #tpu.pipeline_mode<synchronous>, transform_indices = @transform_1, window_bounds = array<i64: 4, 16, 128>}, {pipeline_mode = #tpu.pipeline_mode<synchronous>, transform_indices = @transform_2, window_bounds = array<i64: 9, 128, 128>}, {pipeline_mode = #tpu.pipeline_mode<synchronous>, transform_indices = @transform_3, window_bounds = array<i64: 16, 128>}, {pipeline_mode = #tpu.pipeline_mode<synchronous>, transform_indices = @transform_4, window_bounds = array<i64: 3, 128>}, {pipeline_mode = #tpu.pipeline_mode<synchronous>, transform_indices = @transform_5, window_bounds = array<i64: 3, 128>}, {transform_indices = @transform_6, window_bounds = array<i64: 1, 64, 128>}]} {
    %cst = arith.constant 0.000000e+00 : f32
    %0 = vector.broadcast %cst : f32 to vector<64x128xf32>
    %c0 = arith.constant 0 : index
    %c0_0 = arith.constant 0 : index
    %c0_1 = arith.constant 0 : index
    %c0_2 = arith.constant 0 : index
    %1 = vector.load %arg1[%c0, %c0_0, %c0_1, %c0_2] : memref<1x9x9x16xbf16, #tpu.memory_space<vmem>>, vector<1x8x8x16xbf16>
    %2 = vector.shape_cast %1 : vector<1x8x8x16xbf16> to vector<8x8x16xbf16>
    %3 = vector.shape_cast %2 : vector<8x8x16xbf16> to vector<64x16xbf16>
    %c0_3 = arith.constant 0 : index
    %c0_4 = arith.constant 0 : index
    %c0_5 = arith.constant 0 : index
    %4 = vector.load %arg2[%c0_3, %c0_4, %c0_5] : memref<4x16x128xbf16, #tpu.memory_space<vmem>>, vector<1x16x128xbf16>
    %5 = vector.shape_cast %4 : vector<1x16x128xbf16> to vector<16x128xbf16>
    %cst_6 = arith.constant dense<0.000000e+00> : vector<64x128xf32>
    %6 = tpu.matmul %3, %5, %cst_6 {dimension_numbers = #tpu.dot_dimension_numbers<[1], [0], [0], [1], [0, 0, 1, 1], [], []>} : vector<64x16xbf16>, vector<16x128xbf16>, vector<64x128xf32> -> vector<64x128xf32>
    %7 = arith.addf %0, %6 : vector<64x128xf32>
    %c0_7 = arith.constant 0 : index
    %c0_8 = arith.constant 0 : index
    %c1 = arith.constant 1 : index
    %c0_9 = arith.constant 0 : index
    %8 = vector.load %arg1[%c0_7, %c0_8, %c1, %c0_9] : memref<1x9x9x16xbf16, #tpu.memory_space<vmem>>, vector<1x8x8x16xbf16>
    %9 = vector.shape_cast %8 : vector<1x8x8x16xbf16> to vector<8x8x16xbf16>
    %10 = vector.shape_cast %9 : vector<8x8x16xbf16> to vector<64x16xbf16>
    %c1_10 = arith.constant 1 : index
    %c0_11 = arith.constant 0 : index
    %c0_12 = arith.constant 0 : index
    %11 = vector.load %arg2[%c1_10, %c0_11, %c0_12] : memref<4x16x128xbf16, #tpu.memory_space<vmem>>, vector<1x16x128xbf16>
    %12 = vector.shape_cast %11 : vector<1x16x128xbf16> to vector<16x128xbf16>
    %cst_13 = arith.constant dense<0.000000e+00> : vector<64x128xf32>
    %13 = tpu.matmul %10, %12, %cst_13 {dimension_numbers = #tpu.dot_dimension_numbers<[1], [0], [0], [1], [0, 0, 1, 1], [], []>} : vector<64x16xbf16>, vector<16x128xbf16>, vector<64x128xf32> -> vector<64x128xf32>
    %14 = arith.addf %7, %13 : vector<64x128xf32>
    %c0_14 = arith.constant 0 : index
    %c1_15 = arith.constant 1 : index
    %c0_16 = arith.constant 0 : index
    %c0_17 = arith.constant 0 : index
    %15 = vector.load %arg1[%c0_14, %c1_15, %c0_16, %c0_17] : memref<1x9x9x16xbf16, #tpu.memory_space<vmem>>, vector<1x8x8x16xbf16>
    %16 = vector.shape_cast %15 : vector<1x8x8x16xbf16> to vector<8x8x16xbf16>
    %17 = vector.shape_cast %16 : vector<8x8x16xbf16> to vector<64x16xbf16>
    %c2 = arith.constant 2 : index
    %c0_18 = arith.constant 0 : index
    %c0_19 = arith.constant 0 : index
    %18 = vector.load %arg2[%c2, %c0_18, %c0_19] : memref<4x16x128xbf16, #tpu.memory_space<vmem>>, vector<1x16x128xbf16>
    %19 = vector.shape_cast %18 : vector<1x16x128xbf16> to vector<16x128xbf16>
    %cst_20 = arith.constant dense<0.000000e+00> : vector<64x128xf32>
    %20 = tpu.matmul %17, %19, %cst_20 {dimension_numbers = #tpu.dot_dimension_numbers<[1], [0], [0], [1], [0, 0, 1, 1], [], []>} : vector<64x16xbf16>, vector<16x128xbf16>, vector<64x128xf32> -> vector<64x128xf32>
    %21 = arith.addf %14, %20 : vector<64x128xf32>
    %c0_21 = arith.constant 0 : index
    %c1_22 = arith.constant 1 : index
    %c1_23 = arith.constant 1 : index
    %c0_24 = arith.constant 0 : index
    %22 = vector.load %arg1[%c0_21, %c1_22, %c1_23, %c0_24] : memref<1x9x9x16xbf16, #tpu.memory_space<vmem>>, vector<1x8x8x16xbf16>
    %23 = vector.shape_cast %22 : vector<1x8x8x16xbf16> to vector<8x8x16xbf16>
    %24 = vector.shape_cast %23 : vector<8x8x16xbf16> to vector<64x16xbf16>
    %c3 = arith.constant 3 : index
    %c0_25 = arith.constant 0 : index
    %c0_26 = arith.constant 0 : index
    %25 = vector.load %arg2[%c3, %c0_25, %c0_26] : memref<4x16x128xbf16, #tpu.memory_space<vmem>>, vector<1x16x128xbf16>
    %26 = vector.shape_cast %25 : vector<1x16x128xbf16> to vector<16x128xbf16>
    %cst_27 = arith.constant dense<0.000000e+00> : vector<64x128xf32>
    %27 = tpu.matmul %24, %26, %cst_27 {dimension_numbers = #tpu.dot_dimension_numbers<[1], [0], [0], [1], [0, 0, 1, 1], [], []>} : vector<64x16xbf16>, vector<16x128xbf16>, vector<64x128xf32> -> vector<64x128xf32>
    %28 = arith.addf %21, %27 : vector<64x128xf32>
    %c0_28 = arith.constant 0 : index
    %c0_29 = arith.constant 0 : index
    %29 = vector.load %arg5[%c0_28, %c0_29] : memref<3x128xf32, #tpu.memory_space<vmem>>, vector<1x128xf32>
    %30 = vector.broadcast %29 : vector<1x128xf32> to vector<64x128xf32>
    %31 = arith.mulf %28, %30 : vector<64x128xf32>
    %c0_30 = arith.constant 0 : index
    %c0_31 = arith.constant 0 : index
    %32 = vector.load %arg6[%c0_30, %c0_31] : memref<3x128xf32, #tpu.memory_space<vmem>>, vector<1x128xf32>
    %33 = vector.broadcast %32 : vector<1x128xf32> to vector<64x128xf32>
    %34 = arith.addf %31, %33 : vector<64x128xf32>
    %cst_32 = arith.constant 0.000000e+00 : f32
    %35 = vector.broadcast %cst_32 : f32 to vector<64x128xf32>
    %36 = arith.maximumf %34, %35 : vector<64x128xf32>
    %cst_33 = arith.constant 0.000000e+00 : f32
    %37 = vector.broadcast %cst_33 : f32 to vector<1x10x128xf32>
    %c0_34 = arith.constant 0 : index
    %c0_35 = arith.constant 0 : index
    %c0_36 = arith.constant 0 : index
    %38 = vector.load %arg8[%c0_34, %c0_35, %c0_36] : memref<10x10x128xf32, #tpu.memory_space<vmem>>, vector<1x10x128xf32>
    tpu.vector_store %arg8[%c0_34, %c0_35, %c0_36], %37 {strides = array<i32>} : memref<10x10x128xf32, #tpu.memory_space<vmem>>, vector<1x10x128xf32>,
    %cst_37 = arith.constant 0.000000e+00 : f32
    %39 = vector.broadcast %cst_37 : f32 to vector<1x10x128xf32>
    %c9 = arith.constant 9 : index
    %c0_38 = arith.constant 0 : index
    %c0_39 = arith.constant 0 : index
    %40 = vector.load %arg8[%c9, %c0_38, %c0_39] : memref<10x10x128xf32, #tpu.memory_space<vmem>>, vector<1x10x128xf32>
    tpu.vector_store %arg8[%c9, %c0_38, %c0_39], %39 {strides = array<i32>} : memref<10x10x128xf32, #tpu.memory_space<vmem>>, vector<1x10x128xf32>,
    %cst_40 = arith.constant 0.000000e+00 : f32
    %41 = vector.broadcast %cst_40 : f32 to vector<8x1x128xf32>
    %c1_41 = arith.constant 1 : index
    %c0_42 = arith.constant 0 : index
    %c0_43 = arith.constant 0 : index
    %42 = vector.load %arg8[%c1_41, %c0_42, %c0_43] : memref<10x10x128xf32, #tpu.memory_space<vmem>>, vector<8x1x128xf32>
    tpu.vector_store %arg8[%c1_41, %c0_42, %c0_43], %41 {strides = array<i32>} : memref<10x10x128xf32, #tpu.memory_space<vmem>>, vector<8x1x128xf32>,
    %cst_44 = arith.constant 0.000000e+00 : f32
    %43 = vector.broadcast %cst_44 : f32 to vector<8x1x128xf32>
    %c1_45 = arith.constant 1 : index
    %c9_46 = arith.constant 9 : index
    %c0_47 = arith.constant 0 : index
    %44 = vector.load %arg8[%c1_45, %c9_46, %c0_47] : memref<10x10x128xf32, #tpu.memory_space<vmem>>, vector<8x1x128xf32>
    tpu.vector_store %arg8[%c1_45, %c9_46, %c0_47], %43 {strides = array<i32>} : memref<10x10x128xf32, #tpu.memory_space<vmem>>, vector<8x1x128xf32>,
    %45 = vector.shape_cast %36 : vector<64x128xf32> to vector<8x8x128xf32>
    %c1_48 = arith.constant 1 : index
    %c1_49 = arith.constant 1 : index
    %c0_50 = arith.constant 0 : index
    %46 = vector.load %arg8[%c1_48, %c1_49, %c0_50] : memref<10x10x128xf32, #tpu.memory_space<vmem>>, vector<8x8x128xf32>
    tpu.vector_store %arg8[%c1_48, %c1_49, %c0_50], %45 {strides = array<i32>} : memref<10x10x128xf32, #tpu.memory_space<vmem>>, vector<8x8x128xf32>,
    %cst_51 = arith.constant 0.000000e+00 : f32
    %47 = vector.broadcast %cst_51 : f32 to vector<64x128xf32>
    %c0_52 = arith.constant 0 : index
    %c0_53 = arith.constant 0 : index
    %c0_54 = arith.constant 0 : index
    %48 = vector.load %arg8[%c0_52, %c0_53, %c0_54] : memref<10x10x128xf32, #tpu.memory_space<vmem>>, vector<8x8x128xf32>
    %49 = vector.shape_cast %48 : vector<8x8x128xf32> to vector<64x128xf32>
    %50 = arith.truncf %49 : vector<64x128xf32> to vector<64x128xbf16>
    %c0_55 = arith.constant 0 : index
    %c0_56 = arith.constant 0 : index
    %c0_57 = arith.constant 0 : index
    %51 = vector.load %arg3[%c0_55, %c0_56, %c0_57] : memref<9x128x128xbf16, #tpu.memory_space<vmem>>, vector<1x128x128xbf16>
    %52 = vector.shape_cast %51 : vector<1x128x128xbf16> to vector<128x128xbf16>
    %cst_58 = arith.constant dense<0.000000e+00> : vector<64x128xf32>
    %53 = tpu.matmul %50, %52, %cst_58 {dimension_numbers = #tpu.dot_dimension_numbers<[1], [0], [0], [1], [0, 0, 1, 1], [], []>} : vector<64x128xbf16>, vector<128x128xbf16>, vector<64x128xf32> -> vector<64x128xf32>
    %54 = arith.addf %47, %53 : vector<64x128xf32>
    %c0_59 = arith.constant 0 : index
    %c1_60 = arith.constant 1 : index
    %c0_61 = arith.constant 0 : index
    %55 = vector.load %arg8[%c0_59, %c1_60, %c0_61] : memref<10x10x128xf32, #tpu.memory_space<vmem>>, vector<8x8x128xf32>
    %56 = vector.shape_cast %55 : vector<8x8x128xf32> to vector<64x128xf32>
    %57 = arith.truncf %56 : vector<64x128xf32> to vector<64x128xbf16>
    %c1_62 = arith.constant 1 : index
    %c0_63 = arith.constant 0 : index
    %c0_64 = arith.constant 0 : index
    %58 = vector.load %arg3[%c1_62, %c0_63, %c0_64] : memref<9x128x128xbf16, #tpu.memory_space<vmem>>, vector<1x128x128xbf16>
    %59 = vector.shape_cast %58 : vector<1x128x128xbf16> to vector<128x128xbf16>
    %cst_65 = arith.constant dense<0.000000e+00> : vector<64x128xf32>
    %60 = tpu.matmul %57, %59, %cst_65 {dimension_numbers = #tpu.dot_dimension_numbers<[1], [0], [0], [1], [0, 0, 1, 1], [], []>} : vector<64x128xbf16>, vector<128x128xbf16>, vector<64x128xf32> -> vector<64x128xf32>
    %61 = arith.addf %54, %60 : vector<64x128xf32>
    %c0_66 = arith.constant 0 : index
    %c2_67 = arith.constant 2 : index
    %c0_68 = arith.constant 0 : index
    %62 = vector.load %arg8[%c0_66, %c2_67, %c0_68] : memref<10x10x128xf32, #tpu.memory_space<vmem>>, vector<8x8x128xf32>
    %63 = vector.shape_cast %62 : vector<8x8x128xf32> to vector<64x128xf32>
    %64 = arith.truncf %63 : vector<64x128xf32> to vector<64x128xbf16>
    %c2_69 = arith.constant 2 : index
    %c0_70 = arith.constant 0 : index
    %c0_71 = arith.constant 0 : index
    %65 = vector.load %arg3[%c2_69, %c0_70, %c0_71] : memref<9x128x128xbf16, #tpu.memory_space<vmem>>, vector<1x128x128xbf16>
    %66 = vector.shape_cast %65 : vector<1x128x128xbf16> to vector<128x128xbf16>
    %cst_72 = arith.constant dense<0.000000e+00> : vector<64x128xf32>
    %67 = tpu.matmul %64, %66, %cst_72 {dimension_numbers = #tpu.dot_dimension_numbers<[1], [0], [0], [1], [0, 0, 1, 1], [], []>} : vector<64x128xbf16>, vector<128x128xbf16>, vector<64x128xf32> -> vector<64x128xf32>
    %68 = arith.addf %61, %67 : vector<64x128xf32>
    %c1_73 = arith.constant 1 : index
    %c0_74 = arith.constant 0 : index
    %c0_75 = arith.constant 0 : index
    %69 = vector.load %arg8[%c1_73, %c0_74, %c0_75] : memref<10x10x128xf32, #tpu.memory_space<vmem>>, vector<8x8x128xf32>
    %70 = vector.shape_cast %69 : vector<8x8x128xf32> to vector<64x128xf32>
    %71 = arith.truncf %70 : vector<64x128xf32> to vector<64x128xbf16>
    %c3_76 = arith.constant 3 : index
    %c0_77 = arith.constant 0 : index
    %c0_78 = arith.constant 0 : index
    %72 = vector.load %arg3[%c3_76, %c0_77, %c0_78] : memref<9x128x128xbf16, #tpu.memory_space<vmem>>, vector<1x128x128xbf16>
    %73 = vector.shape_cast %72 : vector<1x128x128xbf16> to vector<128x128xbf16>
    %cst_79 = arith.constant dense<0.000000e+00> : vector<64x128xf32>
    %74 = tpu.matmul %71, %73, %cst_79 {dimension_numbers = #tpu.dot_dimension_numbers<[1], [0], [0], [1], [0, 0, 1, 1], [], []>} : vector<64x128xbf16>, vector<128x128xbf16>, vector<64x128xf32> -> vector<64x128xf32>
    %75 = arith.addf %68, %74 : vector<64x128xf32>
    %c1_80 = arith.constant 1 : index
    %c1_81 = arith.constant 1 : index
    %c0_82 = arith.constant 0 : index
    %76 = vector.load %arg8[%c1_80, %c1_81, %c0_82] : memref<10x10x128xf32, #tpu.memory_space<vmem>>, vector<8x8x128xf32>
    %77 = vector.shape_cast %76 : vector<8x8x128xf32> to vector<64x128xf32>
    %78 = arith.truncf %77 : vector<64x128xf32> to vector<64x128xbf16>
    %c4 = arith.constant 4 : index
    %c0_83 = arith.constant 0 : index
    %c0_84 = arith.constant 0 : index
    %79 = vector.load %arg3[%c4, %c0_83, %c0_84] : memref<9x128x128xbf16, #tpu.memory_space<vmem>>, vector<1x128x128xbf16>
    %80 = vector.shape_cast %79 : vector<1x128x128xbf16> to vector<128x128xbf16>
    %cst_85 = arith.constant dense<0.000000e+00> : vector<64x128xf32>
    %81 = tpu.matmul %78, %80, %cst_85 {dimension_numbers = #tpu.dot_dimension_numbers<[1], [0], [0], [1], [0, 0, 1, 1], [], []>} : vector<64x128xbf16>, vector<128x128xbf16>, vector<64x128xf32> -> vector<64x128xf32>
    %82 = arith.addf %75, %81 : vector<64x128xf32>
    %c1_86 = arith.constant 1 : index
    %c2_87 = arith.constant 2 : index
    %c0_88 = arith.constant 0 : index
    %83 = vector.load %arg8[%c1_86, %c2_87, %c0_88] : memref<10x10x128xf32, #tpu.memory_space<vmem>>, vector<8x8x128xf32>
    %84 = vector.shape_cast %83 : vector<8x8x128xf32> to vector<64x128xf32>
    %85 = arith.truncf %84 : vector<64x128xf32> to vector<64x128xbf16>
    %c5 = arith.constant 5 : index
    %c0_89 = arith.constant 0 : index
    %c0_90 = arith.constant 0 : index
    %86 = vector.load %arg3[%c5, %c0_89, %c0_90] : memref<9x128x128xbf16, #tpu.memory_space<vmem>>, vector<1x128x128xbf16>
    %87 = vector.shape_cast %86 : vector<1x128x128xbf16> to vector<128x128xbf16>
    %cst_91 = arith.constant dense<0.000000e+00> : vector<64x128xf32>
    %88 = tpu.matmul %85, %87, %cst_91 {dimension_numbers = #tpu.dot_dimension_numbers<[1], [0], [0], [1], [0, 0, 1, 1], [], []>} : vector<64x128xbf16>, vector<128x128xbf16>, vector<64x128xf32> -> vector<64x128xf32>
    %89 = arith.addf %82, %88 : vector<64x128xf32>
    %c2_92 = arith.constant 2 : index
    %c0_93 = arith.constant 0 : index
    %c0_94 = arith.constant 0 : index
    %90 = vector.load %arg8[%c2_92, %c0_93, %c0_94] : memref<10x10x128xf32, #tpu.memory_space<vmem>>, vector<8x8x128xf32>
    %91 = vector.shape_cast %90 : vector<8x8x128xf32> to vector<64x128xf32>
    %92 = arith.truncf %91 : vector<64x128xf32> to vector<64x128xbf16>
    %c6 = arith.constant 6 : index
    %c0_95 = arith.constant 0 : index
    %c0_96 = arith.constant 0 : index
    %93 = vector.load %arg3[%c6, %c0_95, %c0_96] : memref<9x128x128xbf16, #tpu.memory_space<vmem>>, vector<1x128x128xbf16>
    %94 = vector.shape_cast %93 : vector<1x128x128xbf16> to vector<128x128xbf16>
    %cst_97 = arith.constant dense<0.000000e+00> : vector<64x128xf32>
    %95 = tpu.matmul %92, %94, %cst_97 {dimension_numbers = #tpu.dot_dimension_numbers<[1], [0], [0], [1], [0, 0, 1, 1], [], []>} : vector<64x128xbf16>, vector<128x128xbf16>, vector<64x128xf32> -> vector<64x128xf32>
    %96 = arith.addf %89, %95 : vector<64x128xf32>
    %c2_98 = arith.constant 2 : index
    %c1_99 = arith.constant 1 : index
    %c0_100 = arith.constant 0 : index
    %97 = vector.load %arg8[%c2_98, %c1_99, %c0_100] : memref<10x10x128xf32, #tpu.memory_space<vmem>>, vector<8x8x128xf32>
    %98 = vector.shape_cast %97 : vector<8x8x128xf32> to vector<64x128xf32>
    %99 = arith.truncf %98 : vector<64x128xf32> to vector<64x128xbf16>
    %c7 = arith.constant 7 : index
    %c0_101 = arith.constant 0 : index
    %c0_102 = arith.constant 0 : index
    %100 = vector.load %arg3[%c7, %c0_101, %c0_102] : memref<9x128x128xbf16, #tpu.memory_space<vmem>>, vector<1x128x128xbf16>
    %101 = vector.shape_cast %100 : vector<1x128x128xbf16> to vector<128x128xbf16>
    %cst_103 = arith.constant dense<0.000000e+00> : vector<64x128xf32>
    %102 = tpu.matmul %99, %101, %cst_103 {dimension_numbers = #tpu.dot_dimension_numbers<[1], [0], [0], [1], [0, 0, 1, 1], [], []>} : vector<64x128xbf16>, vector<128x128xbf16>, vector<64x128xf32> -> vector<64x128xf32>
    %103 = arith.addf %96, %102 : vector<64x128xf32>
    %c2_104 = arith.constant 2 : index
    %c2_105 = arith.constant 2 : index
    %c0_106 = arith.constant 0 : index
    %104 = vector.load %arg8[%c2_104, %c2_105, %c0_106] : memref<10x10x128xf32, #tpu.memory_space<vmem>>, vector<8x8x128xf32>
    %105 = vector.shape_cast %104 : vector<8x8x128xf32> to vector<64x128xf32>
    %106 = arith.truncf %105 : vector<64x128xf32> to vector<64x128xbf16>
    %c8 = arith.constant 8 : index
    %c0_107 = arith.constant 0 : index
    %c0_108 = arith.constant 0 : index
    %107 = vector.load %arg3[%c8, %c0_107, %c0_108] : memref<9x128x128xbf16, #tpu.memory_space<vmem>>, vector<1x128x128xbf16>
    %108 = vector.shape_cast %107 : vector<1x128x128xbf16> to vector<128x128xbf16>
    %cst_109 = arith.constant dense<0.000000e+00> : vector<64x128xf32>
    %109 = tpu.matmul %106, %108, %cst_109 {dimension_numbers = #tpu.dot_dimension_numbers<[1], [0], [0], [1], [0, 0, 1, 1], [], []>} : vector<64x128xbf16>, vector<128x128xbf16>, vector<64x128xf32> -> vector<64x128xf32>
    %110 = arith.addf %103, %109 : vector<64x128xf32>
    %c1_110 = arith.constant 1 : index
    %c0_111 = arith.constant 0 : index
    %111 = vector.load %arg5[%c1_110, %c0_111] : memref<3x128xf32, #tpu.memory_space<vmem>>, vector<1x128xf32>
    %112 = vector.broadcast %111 : vector<1x128xf32> to vector<64x128xf32>
    %113 = arith.mulf %110, %112 : vector<64x128xf32>
    %c1_112 = arith.constant 1 : index
    %c0_113 = arith.constant 0 : index
    %114 = vector.load %arg6[%c1_112, %c0_113] : memref<3x128xf32, #tpu.memory_space<vmem>>, vector<1x128xf32>
    %115 = vector.broadcast %114 : vector<1x128xf32> to vector<64x128xf32>
    %116 = arith.addf %113, %115 : vector<64x128xf32>
    %c0_114 = arith.constant 0 : index
    %c0_115 = arith.constant 0 : index
    %117 = vector.load %arg4[%c0_114, %c0_115] : memref<16x128xbf16, #tpu.memory_space<vmem>>, vector<16x128xbf16>
    %cst_116 = arith.constant dense<0.000000e+00> : vector<64x128xf32>
    %118 = tpu.matmul %3, %117, %cst_116 {dimension_numbers = #tpu.dot_dimension_numbers<[1], [0], [0], [1], [0, 0, 1, 1], [], []>} : vector<64x16xbf16>, vector<16x128xbf16>, vector<64x128xf32> -> vector<64x128xf32>
    %c2_117 = arith.constant 2 : index
    %c0_118 = arith.constant 0 : index
    %119 = vector.load %arg5[%c2_117, %c0_118] : memref<3x128xf32, #tpu.memory_space<vmem>>, vector<1x128xf32>
    %120 = vector.broadcast %119 : vector<1x128xf32> to vector<64x128xf32>
    %121 = arith.mulf %118, %120 : vector<64x128xf32>
    %c2_119 = arith.constant 2 : index
    %c0_120 = arith.constant 0 : index
    %122 = vector.load %arg6[%c2_119, %c0_120] : memref<3x128xf32, #tpu.memory_space<vmem>>, vector<1x128xf32>
    %123 = vector.broadcast %122 : vector<1x128xf32> to vector<64x128xf32>
    %124 = arith.addf %121, %123 : vector<64x128xf32>
    %125 = arith.addf %116, %124 : vector<64x128xf32>
    %cst_121 = arith.constant 0.000000e+00 : f32
    %126 = vector.broadcast %cst_121 : f32 to vector<64x128xf32>
    %127 = arith.maximumf %125, %126 : vector<64x128xf32>
    %128 = arith.truncf %127 : vector<64x128xf32> to vector<64x128xbf16>
    %c0_122 = arith.constant 0 : index
    %c0_123 = arith.constant 0 : index
    %c0_124 = arith.constant 0 : index
    %129 = vector.load %arg7[%c0_122, %c0_123, %c0_124] : memref<1x64x128xbf16, #tpu.memory_space<vmem>>, vector<1x64x128xbf16>
    %130 = vector.shape_cast %129 : vector<1x64x128xbf16> to vector<64x128xbf16>
    %131 = vector.shape_cast %128 : vector<64x128xbf16> to vector<1x64x128xbf16>
    tpu.vector_store %arg7[%c0_122, %c0_123, %c0_124], %131 {strides = array<i32>} : memref<1x64x128xbf16, #tpu.memory_space<vmem>>, vector<1x64x128xbf16>,
    return
  }
  func.func @transform_0(%arg0: i32) -> (i32, i32, i32, i32) {
    %c0_i32 = arith.constant 0 : i32
    %c0_i32_0 = arith.constant 0 : i32
    %c0_i32_1 = arith.constant 0 : i32
    %c0_i32_2 = arith.constant 0 : i32
    return %arg0, %c0_i32, %c0_i32_0, %c0_i32_1 : i32, i32, i32, i32
  }
  func.func @transform_1(%arg0: i32) -> (i32, i32, i32) {
    %c0_i32 = arith.constant 0 : i32
    %c0_i32_0 = arith.constant 0 : i32
    %c0_i32_1 = arith.constant 0 : i32
    %c0_i32_2 = arith.constant 0 : i32
    return %c0_i32, %c0_i32_0, %c0_i32_1 : i32, i32, i32
  }
  func.func @transform_2(%arg0: i32) -> (i32, i32, i32) {
    %c0_i32 = arith.constant 0 : i32
    %c0_i32_0 = arith.constant 0 : i32
    %c0_i32_1 = arith.constant 0 : i32
    %c0_i32_2 = arith.constant 0 : i32
    return %c0_i32, %c0_i32_0, %c0_i32_1 : i32, i32, i32
  }
  func.func @transform_3(%arg0: i32) -> (i32, i32) {
    %c0_i32 = arith.constant 0 : i32
    %c0_i32_0 = arith.constant 0 : i32
    %c0_i32_1 = arith.constant 0 : i32
    return %c0_i32, %c0_i32_0 : i32, i32
  }
  func.func @transform_4(%arg0: i32) -> (i32, i32) {
    %c0_i32 = arith.constant 0 : i32
    %c0_i32_0 = arith.constant 0 : i32
    %c0_i32_1 = arith.constant 0 : i32
    return %c0_i32, %c0_i32_0 : i32, i32
  }
  func.func @transform_5(%arg0: i32) -> (i32, i32) {
    %c0_i32 = arith.constant 0 : i32
    %c0_i32_0 = arith.constant 0 : i32
    %c0_i32_1 = arith.constant 0 : i32
    return %c0_i32, %c0_i32_0 : i32, i32
  }
  func.func @transform_6(%arg0: i32) -> (i32, i32, i32) {
    %c0_i32 = arith.constant 0 : i32
    %c0_i32_0 = arith.constant 0 : i32
    %c0_i32_1 = arith.constant 0 : i32
    return %arg0, %c0_i32, %c0_i32_0 : i32, i32, i32
  }
}

</mosaic_0001>

<llo_original>
// kernel: basic_block_forward.1
$region0: #{basic_block_forward.1}
  #allocation0 [shape = 'u32[]', space=smem, size = 0x4, offset = 0x4, fixed_abs, tag = 'smem constant byte address 0x4 - core index']
  #allocation1 [shape = 'u32[144,128]{1,0:T(1,128)}', space=vmem, size = 0x12000, scoped, tag = 'internal scratch']
  #allocation2 [shape = 'f32[10,10,128]{2,1,0:T(8,128)}', space=vmem, size = 0x14000, scoped, tag = 'scratch operand']
  %s0 = inlined_call_operand.vmem [shape: bf16[2,9,9,16], index: 0, kind: input, shape index: {}]
  %s1 = inlined_call_operand.vmem [shape: bf16[4,16,128], index: 1, kind: input, shape index: {}]
  %s2 = inlined_call_operand.vmem [shape: bf16[9,128,128], index: 2, kind: input, shape index: {}]
  %s3 = inlined_call_operand.vmem [shape: bf16[16,128], index: 3, kind: input, shape index: {}]
  %s4 = inlined_call_operand.vmem [shape: f32[3,128], index: 4, kind: input, shape index: {}]
  %s5 = inlined_call_operand.vmem [shape: f32[3,128], index: 5, kind: input, shape index: {}]
  %s6 = inlined_call_operand.vmem [shape: bf16[2,64,128], index: 6, kind: output, shape index: {}]
  %s7 = sld [smem:[#allocation0]]
  $region57: #{basic_block_forward.1} parent=0
    _
  %s9 = ssub.s32 1, %s7
  %s10 = scalar_select 0, %s9, %s7
  loop: start=0, step=1, limit=4
  $region2: #{basic_block_forward.1} parent=0 // loop_pre_header
    _
  $region3: #{basic_block_forward.1} parent=0 // loop_header
    %s12 = sphi 0, %s16
    %p13 = scmp.ge.s32.totalorder %s12, 4
    %s22 = sphi 0, %s24
    %s25 = sphi 0, %s22
    %s26 = sphi 0, %s25
    %s42 = sphi 0, %s26
    %s46 = sphi 0, %s46
    %s48 = sphi 0, %s46
    %s49 = sphi 0, %s48
    %s63 = sphi 0, %s49
    %s67 = sphi 0, %s67
    %s69 = sphi 0, %s67
    %s70 = sphi 0, %s69
    %s84 = sphi 0, %s70
    %s88 = sphi 0, %s88
    %s90 = sphi 0, %s88
    %s91 = sphi 0, %s90
    %s105 = sphi 0, %s91
    %s109 = sphi 0, %s109
    %s111 = sphi 0, %s109
    %s112 = sphi 0, %s111
    %s126 = sphi 0, %s112
    %s130 = sphi 0, %s130
    %s132 = sphi 0, %s130
    %s133 = sphi 0, %s132
    %s147 = sphi 0, %s133
    %s153 = sphi 0, %s155
    %s156 = sphi 0, %s153
    %s157 = sphi 0, %s156
    %s173 = sphi 0, %s157
  $region4: #{basic_block_forward.1} parent=0 // loop_header_branch
    %15 = sbr.rel (%p13) target = $region8
  $region5: #{basic_block_forward.1} parent=0 // loop_body
    %s17 = ssub.s32 %s12, 1
    %s18 = ssub.s32 %s12, 2
    %s19 = sadd.s32 %s12, 1
    %s20 = ssub.s32 %s12, %s19
    %p21 = scmp.eq.s32.totalorder %s20, 0
    %s23 = sadd.s32 %s22, 1
    %s24 = scalar_select %p21, %s22, %s23
    %p27 = pneg %p21
    %p28 = scmp.eq.s32.totalorder %s12, 1
    %p29 = por %p27, %p28
    %p30 = scmp.ne.s32.totalorder %s22, %s25
    %p31 = scmp.eq.s32.totalorder %s12, 0
    %p32 = por %p30, %p31
    %p33 = scmp.ne.s32.totalorder %s22, %s25
    %p34 = scmp.eq.s32.totalorder %s17, 1
    %p35 = por %p33, %p34
    %p36 = scmp.ne.s32.totalorder %s25, %s26
    %p37 = scmp.eq.s32.totalorder %s17, 0
    %p38 = por %p36, %p37
    %p39 = scmp.ne.s32.totalorder %s25, %s26
    %p40 = scmp.eq.s32.totalorder %s18, 1
    %p41 = por %p39, %p40
    %p43 = scmp.ne.s32.totalorder %s26, %s42
    %p44 = scmp.eq.s32.totalorder %s18, 0
    %p45 = por %p43, %p44
    %s47 = sadd.s32 %s46, 1
    %p50 = scmp.eq.s32.totalorder %s12, 1
    %p51 = scmp.ne.s32.totalorder %s46, %s48
    %p52 = scmp.eq.s32.totalorder %s12, 0
    %p53 = por %p51, %p52
    %p54 = scmp.ne.s32.totalorder %s46, %s48
    %p55 = scmp.eq.s32.totalorder %s17, 1
    %p56 = por %p54, %p55
    %p57 = scmp.ne.s32.totalorder %s48, %s49
    %p58 = scmp.eq.s32.totalorder %s17, 0
    %p59 = por %p57, %p58
    %p60 = scmp.ne.s32.totalorder %s48, %s49
    %p61 = scmp.eq.s32.totalorder %s18, 1
    %p62 = por %p60, %p61
    %p64 = scmp.ne.s32.totalorder %s49, %s63
    %p65 = scmp.eq.s32.totalorder %s18, 0
    %p66 = por %p64, %p65
    %s68 = sadd.s32 %s67, 1
    %p71 = scmp.eq.s32.totalorder %s12, 1
    %p72 = scmp.ne.s32.totalorder %s67, %s69
    %p73 = scmp.eq.s32.totalorder %s12, 0
    %p74 = por %p72, %p73
    %p75 = scmp.ne.s32.totalorder %s67, %s69
    %p76 = scmp.eq.s32.totalorder %s17, 1
    %p77 = por %p75, %p76
    %p78 = scmp.ne.s32.totalorder %s69, %s70
    %p79 = scmp.eq.s32.totalorder %s17, 0
    %p80 = por %p78, %p79
    %p81 = scmp.ne.s32.totalorder %s69, %s70
    %p82 = scmp.eq.s32.totalorder %s18, 1
    %p83 = por %p81, %p82
    %p85 = scmp.ne.s32.totalorder %s70, %s84
    %p86 = scmp.eq.s32.totalorder %s18, 0
    %p87 = por %p85, %p86
    %s89 = sadd.s32 %s88, 1
    %p92 = scmp.eq.s32.totalorder %s12, 1
    %p93 = scmp.ne.s32.totalorder %s88, %s90
    %p94 = scmp.eq.s32.totalorder %s12, 0
    %p95 = por %p93, %p94
    %p96 = scmp.ne.s32.totalorder %s88, %s90
    %p97 = scmp.eq.s32.totalorder %s17, 1
    %p98 = por %p96, %p97
    %p99 = scmp.ne.s32.totalorder %s90, %s91
    %p100 = scmp.eq.s32.totalorder %s17, 0
    %p101 = por %p99, %p100
    %p102 = scmp.ne.s32.totalorder %s90, %s91
    %p103 = scmp.eq.s32.totalorder %s18, 1
    %p104 = por %p102, %p103
    %p106 = scmp.ne.s32.totalorder %s91, %s105
    %p107 = scmp.eq.s32.totalorder %s18, 0
    %p108 = por %p106, %p107
    %s110 = sadd.s32 %s109, 1
    %p113 = scmp.eq.s32.totalorder %s12, 1
    %p114 = scmp.ne.s32.totalorder %s109, %s111
    %p115 = scmp.eq.s32.totalorder %s12, 0
    %p116 = por %p114, %p115
    %p117 = scmp.ne.s32.totalorder %s109, %s111
    %p118 = scmp.eq.s32.totalorder %s17, 1
    %p119 = por %p117, %p118
    %p120 = scmp.ne.s32.totalorder %s111, %s112
    %p121 = scmp.eq.s32.totalorder %s17, 0
    %p122 = por %p120, %p121
    %p123 = scmp.ne.s32.totalorder %s111, %s112
    %p124 = scmp.eq.s32.totalorder %s18, 1
    %p125 = por %p123, %p124
    %p127 = scmp.ne.s32.totalorder %s112, %s126
    %p128 = scmp.eq.s32.totalorder %s18, 0
    %p129 = por %p127, %p128
    %s131 = sadd.s32 %s130, 1
    %p134 = scmp.eq.s32.totalorder %s12, 1
    %p135 = scmp.ne.s32.totalorder %s130, %s132
    %p136 = scmp.eq.s32.totalorder %s12, 0
    %p137 = por %p135, %p136
    %p138 = scmp.ne.s32.totalorder %s130, %s132
    %p139 = scmp.eq.s32.totalorder %s17, 1
    %p140 = por %p138, %p139
    %p141 = scmp.ne.s32.totalorder %s132, %s133
    %p142 = scmp.eq.s32.totalorder %s17, 0
    %p143 = por %p141, %p142
    %p144 = scmp.ne.s32.totalorder %s132, %s133
    %p145 = scmp.eq.s32.totalorder %s18, 1
    %p146 = por %p144, %p145
    %p148 = scmp.ne.s32.totalorder %s133, %s147
    %p149 = scmp.eq.s32.totalorder %s18, 0
    %p150 = por %p148, %p149
    %s151 = ssub.s32 %s12, %s19
    %p152 = scmp.eq.s32.totalorder %s151, 0
    %s154 = sadd.s32 %s153, 1
    %s155 = scalar_select %p152, %s153, %s154
    %p158 = pneg %p152
    %p159 = scmp.eq.s32.totalorder %s12, 1
    %p160 = por %p158, %p159
    %p161 = scmp.ne.s32.totalorder %s153, %s156
    %p162 = scmp.eq.s32.totalorder %s12, 0
    %p163 = por %p161, %p162
    %p164 = scmp.ne.s32.totalorder %s153, %s156
    %p165 = scmp.eq.s32.totalorder %s17, 1
    %p166 = por %p164, %p165
    %p167 = scmp.ne.s32.totalorder %s156, %s157
    %p168 = scmp.eq.s32.totalorder %s17, 0
    %p169 = por %p167, %p168
    %p170 = scmp.ne.s32.totalorder %s156, %s157
    %p171 = scmp.eq.s32.totalorder %s18, 1
    %p172 = por %p170, %p171
    %p174 = scmp.ne.s32.totalorder %s157, %s173
    %p175 = scmp.eq.s32.totalorder %s18, 0
    %p176 = por %p174, %p175
    %p177 = scmp.le.s32.totalorder 1, %s12
    %p178 = scmp.lt.s32.totalorder %s12, 3
    %p179 = pnand %p177, %p178
    %p180 = pneg %p179
    // Predicated region
    $region9: #{basic_block_forward.1} parent=5 // pred_check
      _
    $region10: #{basic_block_forward.1} parent=5 // pred_check_branch
      %182 = sbr.rel (%p179) target = $region12
    $region11: #{basic_block_forward.1} parent=5 // pred_region
      %s183 = ssub.s32 %s12, 1
      // Predicated region
      $region13: #{basic_block_forward.1} parent=11 // pred_check
        %p184 = pneg %p59
      $region14: #{basic_block_forward.1} parent=11 // pred_check_branch
        %186 = sbr.rel (%p184) target = $region16
      $region15: #{basic_block_forward.1} parent=11 // pred_region
        _
      $region16: #{basic_block_forward.1} parent=11 // pred_fallthru
        _
      // Predicated region
      $region17: #{basic_block_forward.1} parent=11 // pred_check
        %p187 = pneg %p80
      $region18: #{basic_block_forward.1} parent=11 // pred_check_branch
        %189 = sbr.rel (%p187) target = $region20
      $region19: #{basic_block_forward.1} parent=11 // pred_region
        _
      $region20: #{basic_block_forward.1} parent=11 // pred_fallthru
        _
      // Predicated region
      $region21: #{basic_block_forward.1} parent=11 // pred_check
        %p190 = pneg %p101
      $region22: #{basic_block_forward.1} parent=11 // pred_check_branch
        %192 = sbr.rel (%p190) target = $region24
      $region23: #{basic_block_forward.1} parent=11 // pred_region
        _
      $region24: #{basic_block_forward.1} parent=11 // pred_fallthru
        _
      // Predicated region
      $region25: #{basic_block_forward.1} parent=11 // pred_check
        %p193 = pneg %p122
      $region26: #{basic_block_forward.1} parent=11 // pred_check_branch
        %195 = sbr.rel (%p193) target = $region28
      $region27: #{basic_block_forward.1} parent=11 // pred_region
        _
      $region28: #{basic_block_forward.1} parent=11 // pred_fallthru
        _
      // Predicated region
      $region29: #{basic_block_forward.1} parent=11 // pred_check
        %p196 = pneg %p143
      $region30: #{basic_block_forward.1} parent=11 // pred_check_branch
        %198 = sbr.rel (%p196) target = $region32
      $region31: #{basic_block_forward.1} parent=11 // pred_region
        _
      $region32: #{basic_block_forward.1} parent=11 // pred_fallthru
        _
    $region12: #{basic_block_forward.1} parent=5 // pred_fallthru
      _
    %p199 = scmp.lt.s32.totalorder %s12, 2
    // Predicated region
    $region33: #{basic_block_forward.1} parent=5 // pred_check
      %p200 = pneg %p199
    $region34: #{basic_block_forward.1} parent=5 // pred_check_branch
      %202 = sbr.rel (%p200) target = $region36
    $region35: #{basic_block_forward.1} parent=5 // pred_region
      // Predicated region
      $region37: #{basic_block_forward.1} parent=35 // pred_check
        %p203 = pneg %p32
      $region38: #{basic_block_forward.1} parent=35 // pred_check_branch
        %205 = sbr.rel (%p203) target = $region40
      $region39: #{basic_block_forward.1} parent=35 // pred_region
        %p206 = scmp.lt.s32.totalorder %s12, 1
        %s207 = scalar_select %p206, %s12, 1
        %s208 = smul.addr %s207, 18
        %s209 = smul.addr %s208, 4
        %s210 = scalar_lea.vmem %s0, %s209
      $region40: #{basic_block_forward.1} parent=35 // pred_fallthru
        _
    $region36: #{basic_block_forward.1} parent=5 // pred_fallthru
      _
    %p211 = scmp.le.s32.totalorder 1, %s12
    %p212 = scmp.lt.s32.totalorder %s12, 3
    %p213 = pnand %p211, %p212
    %p214 = pneg %p213
    // Predicated region
    $region41: #{basic_block_forward.1} parent=5 // pred_check
      _
    $region42: #{basic_block_forward.1} parent=5 // pred_check_branch
      %216 = sbr.rel (%p213) target = $region44
    $region43: #{basic_block_forward.1} parent=5 // pred_region
      %s217 = ssub.s32 %s12, 1
      %p218 = scmp.lt.s32.totalorder %s17, 1
      %s219 = scalar_select %p218, %s17, 1
      %s220 = smul.addr %s219, 18
      %s221 = smul.addr %s220, 4
      %s222 = scalar_lea.vmem %s0, %s221
      %p223 = pneg %p38
      %p224 = pneg %p35
      %p225 = pneg %p59
      %p226 = pneg %p56
      %p227 = pneg %p80
      %p228 = pneg %p77
      %p229 = pneg %p101
      %p230 = pneg %p98
      %p231 = pneg %p122
      %p232 = pneg %p119
      %p233 = pneg %p143
      %p234 = pneg %p140
      %p235 = pneg %p169
      %p236 = pneg %p166
      %p237 = scmp.lt.s32.totalorder %s17, 1
      %s238 = scalar_select %p237, %s17, 1
      %s239 = smul.addr %s238, 8
      %s240 = smul.addr %s239, 4
      %s241 = scalar_lea.vmem %s6, %s240
      %p242 = scmp.lt.s32.totalorder %s17, 1
      %s243 = scalar_select %p242, %s17, 1
      %s244 = smul.addr %s243, 18
      %s245 = smul.addr %s244, 4
      %s246 = scalar_lea.vmem %s0, %s245
      %p247 = scmp.lt.s32.totalorder %s17, 1
      %s248 = scalar_select %p247, %s17, 1
      %s249 = smul.addr %s248, 8
      %s250 = smul.addr %s249, 4
      %s251 = scalar_lea.vmem %s6, %s250
      %v253 = vld [vmem:[%s246] sm:$0xf]
      %v254 = vld [vmem:[%s246 + $0x8] sm:$0xf]
      %v255 = vld [vmem:[%s246 + $0x10] sm:$0xf]
      %v256 = vld [vmem:[%s246 + $0x18] sm:$0xf]
      %v257 = vld [vmem:[%s246 + $0x20] sm:$0xf]
      %v258 = vld [vmem:[%s246 + $0x28] sm:$0xf]
      %v259 = vld [vmem:[%s246 + $0x30] sm:$0xf]
      %v260 = vld [vmem:[%s246 + $0x38] sm:$0xf]
      %v261 = vld [vmem:[%s1] sm:$0xf]
      %v262 = vld [vmem:[%s1 + $0x4] sm:$0xf]
      %v263 = vld [vmem:[%s246 + $0x4] sm:$0x1]
      %v264 = vld [vmem:[%s246 + $0xc] sm:$0x1]
      %v265 = vld [vmem:[%s246 + $0x14] sm:$0x1]
      %v266 = vld [vmem:[%s246 + $0x1c] sm:$0x1]
      %v267 = vld [vmem:[%s246 + $0x24] sm:$0x1]
      %v268 = vld [vmem:[%s246 + $0x2c] sm:$0x1]
      %v269 = vld [vmem:[%s246 + $0x34] sm:$0x1]
      %v270 = vld [vmem:[%s246 + $0x3c] sm:$0x1]
      %vm271 = vsmask.f32 3328
      %vm272 = vsmask.f32 7440
      %vm273 = vmor %vm271, %vm272
      %v275 = vshrl.u32 %v253, 16
      %v277 = vrot.slane %v275, 4
      %v278 = vshll.u32 %v253, 16
      %v280 = vrot.slane %v278, 5
      %v281 = vor.u32 %v277, %v280
      %v282 = vrot.slane %v281, 4
      %v284 = vshll.u32 %v263, 16
      %v286 = vrot.slane %v284, 5
      %v287 = vsel %vm273, %v282, %v286
      %v289 = vshrl.u32 %v254, 16
      %v291 = vrot.slane %v289, 4
      %v292 = vshll.u32 %v254, 16
      %v294 = vrot.slane %v292, 5
      %v295 = vor.u32 %v291, %v294
      %v296 = vrot.slane %v295, 4
      %v298 = vshll.u32 %v264, 16
      %v300 = vrot.slane %v298, 5
      %v301 = vsel %vm273, %v296, %v300
      %v303 = vshrl.u32 %v255, 16
      %v305 = vrot.slane %v303, 4
      %v306 = vshll.u32 %v255, 16
      %v308 = vrot.slane %v306, 5
      %v309 = vor.u32 %v305, %v308
      %v310 = vrot.slane %v309, 4
      %v312 = vshll.u32 %v265, 16
      %v314 = vrot.slane %v312, 5
      %v315 = vsel %vm273, %v310, %v314
      %v317 = vshrl.u32 %v256, 16
      %v319 = vrot.slane %v317, 4
      %v320 = vshll.u32 %v256, 16
      %v322 = vrot.slane %v320, 5
      %v323 = vor.u32 %v319, %v322
      %v324 = vrot.slane %v323, 4
      %v326 = vshll.u32 %v266, 16
      %v328 = vrot.slane %v326, 5
      %v329 = vsel %vm273, %v324, %v328
      %v331 = vshrl.u32 %v257, 16
      %v333 = vrot.slane %v331, 4
      %v334 = vshll.u32 %v257, 16
      %v336 = vrot.slane %v334, 5
      %v337 = vor.u32 %v333, %v336
      %v338 = vrot.slane %v337, 4
      %v340 = vshll.u32 %v267, 16
      %v342 = vrot.slane %v340, 5
      %v343 = vsel %vm273, %v338, %v342
      %v345 = vshrl.u32 %v258, 16
      %v347 = vrot.slane %v345, 4
      %v348 = vshll.u32 %v258, 16
      %v350 = vrot.slane %v348, 5
      %v351 = vor.u32 %v347, %v350
      %v352 = vrot.slane %v351, 4
      %v354 = vshll.u32 %v268, 16
      %v356 = vrot.slane %v354, 5
      %v357 = vsel %vm273, %v352, %v356
      %v359 = vshrl.u32 %v259, 16
      %v361 = vrot.slane %v359, 4
      %v362 = vshll.u32 %v259, 16
      %v364 = vrot.slane %v362, 5
      %v365 = vor.u32 %v361, %v364
      %v366 = vrot.slane %v365, 4
      %v368 = vshll.u32 %v269, 16
      %v370 = vrot.slane %v368, 5
      %v371 = vsel %vm273, %v366, %v370
      %v373 = vshrl.u32 %v260, 16
      %v375 = vrot.slane %v373, 4
      %v376 = vshll.u32 %v260, 16
      %v378 = vrot.slane %v376, 5
      %v379 = vor.u32 %v375, %v378
      %v380 = vrot.slane %v379, 4
      %v382 = vshll.u32 %v270, 16
      %v384 = vrot.slane %v382, 5
      %v385 = vsel %vm273, %v380, %v384
      %s386 = scalar_lea.vmem %s1, 8
      %v387 = vld [vmem:[%s386] sm:$0xf]
      %v388 = vld [vmem:[%s386 + $0x4] sm:$0xf]
      %v389 = vunpack.c.l.b16 %v287
      %v390 = vunpack.c.l.b16 %v301
      %v391 = vunpack.c.l.b16 %v315
      %v392 = vunpack.c.l.b16 %v329
      %v393 = vunpack.c.l.b16 %v343
      %v394 = vunpack.c.l.b16 %v357
      %v395 = vunpack.c.l.b16 %v371
      %v396 = vunpack.c.l.b16 %v385
      %v397 = vpack.c.b16 %v390, %v389
      %v398 = vpack.c.b16 %v392, %v391
      %v399 = vpack.c.b16 %v394, %v393
      %v400 = vpack.c.b16 %v396, %v395
      %v403 = vunpack.c.l.b16 %v387
      %v404 = vunpack.c.l.b16 %v388
      %v405 = vpack.c.b16 %v404, %v403
      %vm407 = vcmask 130048
      %v409 = vsel %vm407, %v397, 0
      %v412 = vsel %vm407, %v398, 0
      %v415 = vsel %vm407, %v399, 0
      %v418 = vsel %vm407, %v400, 0
      %420 = vmatprep.subr.bf16.mxu0 0
      %421 = vmatpush1.bf16.msra.mxu0 0
      %422 = vmatprep.subr.bf16.mxu0 0
      %423 = vmatpush1.bf16.msra.mxu0 0
      %424 = vmatprep.subr.bf16.mxu0 0
      %425 = vmatpush1.bf16.msra.mxu0 0
      %426 = vmatprep.subr.bf16.mxu0 0
      %427 = vmatpush1.bf16.msra.mxu0 0
      %428 = vmatprep.subr.bf16.mxu0 0
      %429 = vmatpush1.bf16.msra.mxu0 0
      %430 = vmatprep.subr.bf16.mxu0 0
      %431 = vmatpush1.bf16.msra.mxu0 0
      %432 = vmatprep.subr.bf16.mxu0 0
      %433 = vmatpush1.bf16.msra.mxu0 0
      %434 = vmatprep.subr.bf16.mxu0 0
      %435 = vmatpush1.bf16.msra.mxu0 %v405
      %436 = vmatprep.subr.bf16.mxu0 0
      %437 = vmatpush2.bf16.msra.mxu0 0
      %438 = vmatprep.subr.bf16.mxu0 0
      %439 = vmatpush2.bf16.msra.mxu0 0
      %440 = vmatprep.subr.bf16.mxu0 0
      %441 = vmatpush2.bf16.msra.mxu0 0
      %442 = vmatprep.subr.bf16.mxu0 0
      %443 = vmatpush2.bf16.msra.mxu0 0
      %444 = vmatprep.subr.bf16.mxu0 0
      %445 = vmatpush2.bf16.msra.mxu0 0
      %446 = vmatprep.subr.bf16.mxu0 0
      %447 = vmatpush2.bf16.msra.mxu0 0
      %448 = vmatprep.subr.bf16.mxu0 0
      %449 = vmatpush2.bf16.msra.mxu0 0
      %450 = vmatprep.subr.bf16.mxu0 0
      %451 = vmatpush2.bf16.msra.mxu0 0
      %452 = vmatprep.mubr.bf16.mxu0 0
      %453 = vmatmul.mubr.bf16.gmra.mxu0 %v409
      %v454 = vpop.f32.mrf.mxu0
      %v455 = vadd.f32 0.0, %v454
      %v456 = vpop.f32.mrf.mxu0
      %v457 = vpop.f32.mrf.mxu0
      %v458 = vadd.f32 0.0, %v457
      %v459 = vpop.f32.mrf.mxu0
      %460 = vmatprep.mubr.bf16.mxu0 0
      %461 = vmatmul.mubr.bf16.gmra.mxu0 %v412
      %v462 = vpop.f32.mrf.mxu0
      %v463 = vadd.f32 0.0, %v462
      %v464 = vpop.f32.mrf.mxu0
      %v465 = vpop.f32.mrf.mxu0
      %v466 = vadd.f32 0.0, %v465
      %v467 = vpop.f32.mrf.mxu0
      %468 = vmatprep.mubr.bf16.mxu0 0
      %469 = vmatmul.mubr.bf16.gmra.mxu0 %v415
      %v470 = vpop.f32.mrf.mxu0
      %v471 = vadd.f32 0.0, %v470
      %v472 = vpop.f32.mrf.mxu0
      %v473 = vpop.f32.mrf.mxu0
      %v474 = vadd.f32 0.0, %v473
      %v475 = vpop.f32.mrf.mxu0
      %476 = vmatprep.mubr.bf16.mxu0 0
      %477 = vmatmul.mubr.bf16.gmra.mxu0 %v418
      %v478 = vpop.f32.mrf.mxu0
      %v479 = vadd.f32 0.0, %v478
      %v480 = vpop.f32.mrf.mxu0
      %v481 = vpop.f32.mrf.mxu0
      %v482 = vadd.f32 0.0, %v481
      %v483 = vpop.f32.mrf.mxu0
      %484 = vdwg.mxu0
      %v493 = vunpack.c.l.b16 %v253
      %v494 = vunpack.c.l.b16 %v254
      %v495 = vunpack.c.l.b16 %v255
      %v496 = vunpack.c.l.b16 %v256
      %v497 = vunpack.c.l.b16 %v257
      %v498 = vunpack.c.l.b16 %v258
      %v499 = vunpack.c.l.b16 %v259
      %v500 = vunpack.c.l.b16 %v260
      %v501 = vpack.c.b16 %v494, %v493
      %v502 = vpack.c.b16 %v496, %v495
      %v503 = vpack.c.b16 %v498, %v497
      %v504 = vpack.c.b16 %v500, %v499
      %v507 = vunpack.c.l.b16 %v261
      %v508 = vunpack.c.l.b16 %v262
      %v509 = vpack.c.b16 %v508, %v507
      %v512 = vsel %vm407, %v501, 0
      %v515 = vsel %vm407, %v502, 0
      %v518 = vsel %vm407, %v503, 0
      %v521 = vsel %vm407, %v504, 0
      %523 = vmatprep.subr.bf16.mxu0 0
      %524 = vmatpush1.bf16.msra.mxu0 0
      %525 = vmatprep.subr.bf16.mxu0 0
      %526 = vmatpush1.bf16.msra.mxu0 0
      %527 = vmatprep.subr.bf16.mxu0 0
      %528 = vmatpush1.bf16.msra.mxu0 0
      %529 = vmatprep.subr.bf16.mxu0 0
      %530 = vmatpush1.bf16.msra.mxu0 0
      %531 = vmatprep.subr.bf16.mxu0 0
      %532 = vmatpush1.bf16.msra.mxu0 0
      %533 = vmatprep.subr.bf16.mxu0 0
      %534 = vmatpush1.bf16.msra.mxu0 0
      %535 = vmatprep.subr.bf16.mxu0 0
      %536 = vmatpush1.bf16.msra.mxu0 0
      %537 = vmatprep.subr.bf16.mxu0 0
      %538 = vmatpush1.bf16.msra.mxu0 %v509
      %539 = vmatprep.subr.bf16.mxu0 0
      %540 = vmatpush2.bf16.msra.mxu0 0
      %541 = vmatprep.subr.bf16.mxu0 0
      %542 = vmatpush2.bf16.msra.mxu0 0
      %543 = vmatprep.subr.bf16.mxu0 0
      %544 = vmatpush2.bf16.msra.mxu0 0
      %545 = vmatprep.subr.bf16.mxu0 0
      %546 = vmatpush2.bf16.msra.mxu0 0
      %547 = vmatprep.subr.bf16.mxu0 0
      %548 = vmatpush2.bf16.msra.mxu0 0
      %549 = vmatprep.subr.bf16.mxu0 0
      %550 = vmatpush2.bf16.msra.mxu0 0
      %551 = vmatprep.subr.bf16.mxu0 0
      %552 = vmatpush2.bf16.msra.mxu0 0
      %553 = vmatprep.subr.bf16.mxu0 0
      %554 = vmatpush2.bf16.msra.mxu0 0
      %555 = vmatprep.mubr.bf16.mxu0 0
      %556 = vmatmul.mubr.bf16.gmra.mxu0 %v512
      %v557 = vpop.f32.mrf.mxu0
      %v558 = vadd.f32 %v455, %v557
      %v559 = vpop.f32.mrf.mxu0
      %v560 = vpop.f32.mrf.mxu0
      %v561 = vadd.f32 %v458, %v560
      %v562 = vpop.f32.mrf.mxu0
      %563 = vmatprep.mubr.bf16.mxu0 0
      %564 = vmatmul.mubr.bf16.gmra.mxu0 %v515
      %v565 = vpop.f32.mrf.mxu0
      %v566 = vadd.f32 %v463, %v565
      %v567 = vpop.f32.mrf.mxu0
      %v568 = vpop.f32.mrf.mxu0
      %v569 = vadd.f32 %v466, %v568
      %v570 = vpop.f32.mrf.mxu0
      %571 = vmatprep.mubr.bf16.mxu0 0
      %572 = vmatmul.mubr.bf16.gmra.mxu0 %v518
      %v573 = vpop.f32.mrf.mxu0
      %v574 = vadd.f32 %v471, %v573
      %v575 = vpop.f32.mrf.mxu0
      %v576 = vpop.f32.mrf.mxu0
      %v577 = vadd.f32 %v474, %v576
      %v578 = vpop.f32.mrf.mxu0
      %579 = vmatprep.mubr.bf16.mxu0 0
      %580 = vmatmul.mubr.bf16.gmra.mxu0 %v521
      %v581 = vpop.f32.mrf.mxu0
      %v582 = vadd.f32 %v479, %v581
      %v583 = vpop.f32.mrf.mxu0
      %v584 = vpop.f32.mrf.mxu0
      %v585 = vadd.f32 %v482, %v584
      %v586 = vpop.f32.mrf.mxu0
      %587 = vdwg.mxu0
      %s588 = scalar_lea.vmem %s246, 8
      %v589 = vld [vmem:[%s588] sm:$0xf]
      %v590 = vld [vmem:[%s588 + $0x8] sm:$0xf]
      %v591 = vld [vmem:[%s588 + $0x10] sm:$0xf]
      %v592 = vld [vmem:[%s588 + $0x18] sm:$0xf]
      %v593 = vld [vmem:[%s588 + $0x20] sm:$0xf]
      %v594 = vld [vmem:[%s588 + $0x28] sm:$0xf]
      %v595 = vld [vmem:[%s588 + $0x30] sm:$0xf]
      %v596 = vld [vmem:[%s588 + $0x38] sm:$0xf]
      %s597 = scalar_lea.vmem %s1, 16
      %v598 = vld [vmem:[%s597] sm:$0xf]
      %v599 = vld [vmem:[%s597 + $0x4] sm:$0xf]
      %v608 = vunpack.c.l.b16 %v589
      %v609 = vunpack.c.l.b16 %v590
      %v610 = vunpack.c.l.b16 %v591
      %v611 = vunpack.c.l.b16 %v592
      %v612 = vunpack.c.l.b16 %v593
      %v613 = vunpack.c.l.b16 %v594
      %v614 = vunpack.c.l.b16 %v595
      %v615 = vunpack.c.l.b16 %v596
      %v616 = vpack.c.b16 %v609, %v608
      %v617 = vpack.c.b16 %v611, %v610
      %v618 = vpack.c.b16 %v613, %v612
      %v619 = vpack.c.b16 %v615, %v614
      %v622 = vunpack.c.l.b16 %v598
      %v623 = vunpack.c.l.b16 %v599
      %v624 = vpack.c.b16 %v623, %v622
      %v627 = vsel %vm407, %v616, 0
      %v630 = vsel %vm407, %v617, 0
      %v633 = vsel %vm407, %v618, 0
      %v636 = vsel %vm407, %v619, 0
      %638 = vmatprep.subr.bf16.mxu0 0
      %639 = vmatpush1.bf16.msra.mxu0 0
      %640 = vmatprep.subr.bf16.mxu0 0
      %641 = vmatpush1.bf16.msra.mxu0 0
      %642 = vmatprep.subr.bf16.mxu0 0
      %643 = vmatpush1.bf16.msra.mxu0 0
      %644 = vmatprep.subr.bf16.mxu0 0
      %645 = vmatpush1.bf16.msra.mxu0 0
      %646 = vmatprep.subr.bf16.mxu0 0
      %647 = vmatpush1.bf16.msra.mxu0 0
      %648 = vmatprep.subr.bf16.mxu0 0
      %649 = vmatpush1.bf16.msra.mxu0 0
      %650 = vmatprep.subr.bf16.mxu0 0
      %651 = vmatpush1.bf16.msra.mxu0 0
      %652 = vmatprep.subr.bf16.mxu0 0
      %653 = vmatpush1.bf16.msra.mxu0 %v624
      %654 = vmatprep.subr.bf16.mxu0 0
      %655 = vmatpush2.bf16.msra.mxu0 0
      %656 = vmatprep.subr.bf16.mxu0 0
      %657 = vmatpush2.bf16.msra.mxu0 0
      %658 = vmatprep.subr.bf16.mxu0 0
      %659 = vmatpush2.bf16.msra.mxu0 0
      %660 = vmatprep.subr.bf16.mxu0 0
      %661 = vmatpush2.bf16.msra.mxu0 0
      %662 = vmatprep.subr.bf16.mxu0 0
      %663 = vmatpush2.bf16.msra.mxu0 0
      %664 = vmatprep.subr.bf16.mxu0 0
      %665 = vmatpush2.bf16.msra.mxu0 0
      %666 = vmatprep.subr.bf16.mxu0 0
      %667 = vmatpush2.bf16.msra.mxu0 0
      %668 = vmatprep.subr.bf16.mxu0 0
      %669 = vmatpush2.bf16.msra.mxu0 0
      %670 = vmatprep.mubr.bf16.mxu0 0
      %671 = vmatmul.mubr.bf16.gmra.mxu0 %v627
      %v672 = vpop.f32.mrf.mxu0
      %v673 = vadd.f32 0.0, %v672
      %v674 = vpop.f32.mrf.mxu0
      %v675 = vpop.f32.mrf.mxu0
      %v676 = vadd.f32 0.0, %v675
      %v677 = vpop.f32.mrf.mxu0
      %678 = vmatprep.mubr.bf16.mxu0 0
      %679 = vmatmul.mubr.bf16.gmra.mxu0 %v630
      %v680 = vpop.f32.mrf.mxu0
      %v681 = vadd.f32 0.0, %v680
      %v682 = vpop.f32.mrf.mxu0
      %v683 = vpop.f32.mrf.mxu0
      %v684 = vadd.f32 0.0, %v683
      %v685 = vpop.f32.mrf.mxu0
      %686 = vmatprep.mubr.bf16.mxu0 0
      %687 = vmatmul.mubr.bf16.gmra.mxu0 %v633
      %v688 = vpop.f32.mrf.mxu0
      %v689 = vadd.f32 0.0, %v688
      %v690 = vpop.f32.mrf.mxu0
      %v691 = vpop.f32.mrf.mxu0
      %v692 = vadd.f32 0.0, %v691
      %v693 = vpop.f32.mrf.mxu0
      %694 = vmatprep.mubr.bf16.mxu0 0
      %695 = vmatmul.mubr.bf16.gmra.mxu0 %v636
      %v696 = vpop.f32.mrf.mxu0
      %v697 = vadd.f32 0.0, %v696
      %v698 = vpop.f32.mrf.mxu0
      %v699 = vpop.f32.mrf.mxu0
      %v700 = vadd.f32 0.0, %v699
      %v701 = vpop.f32.mrf.mxu0
      %702 = vdwg.mxu0
      %v703 = vadd.f32 %v558, %v673
      %v704 = vadd.f32 %v561, %v676
      %v705 = vadd.f32 %v566, %v681
      %v706 = vadd.f32 %v569, %v684
      %v707 = vadd.f32 %v574, %v689
      %v708 = vadd.f32 %v577, %v692
      %v709 = vadd.f32 %v582, %v697
      %v710 = vadd.f32 %v585, %v700
      %v711 = vld [vmem:[%s588] sm:$0xf]
      %v712 = vld [vmem:[%s588 + $0x4] sm:$0x1]
      %v713 = vld [vmem:[%s588 + $0x8] sm:$0xf]
      %v714 = vld [vmem:[%s588 + $0xc] sm:$0x1]
      %v715 = vld [vmem:[%s588 + $0x10] sm:$0xf]
      %v716 = vld [vmem:[%s588 + $0x14] sm:$0x1]
      %v717 = vld [vmem:[%s588 + $0x18] sm:$0xf]
      %v718 = vld [vmem:[%s588 + $0x1c] sm:$0x1]
      %v719 = vld [vmem:[%s588 + $0x20] sm:$0xf]
      %v720 = vld [vmem:[%s588 + $0x24] sm:$0x1]
      %v721 = vld [vmem:[%s588 + $0x28] sm:$0xf]
      %v722 = vld [vmem:[%s588 + $0x2c] sm:$0x1]
      %v723 = vld [vmem:[%s588 + $0x30] sm:$0xf]
      %v724 = vld [vmem:[%s588 + $0x34] sm:$0x1]
      %v725 = vld [vmem:[%s588 + $0x38] sm:$0xf]
      %v726 = vld [vmem:[%s588 + $0x3c] sm:$0x1]
      %v728 = vshrl.u32 %v711, 16
      %v730 = vrot.slane %v728, 4
      %v731 = vshll.u32 %v711, 16
      %v733 = vrot.slane %v731, 5
      %v734 = vor.u32 %v730, %v733
      %v735 = vrot.slane %v734, 4
      %v737 = vshll.u32 %v712, 16
      %v739 = vrot.slane %v737, 5
      %v740 = vsel %vm273, %v735, %v739
      %v742 = vshrl.u32 %v713, 16
      %v744 = vrot.slane %v742, 4
      %v745 = vshll.u32 %v713, 16
      %v747 = vrot.slane %v745, 5
      %v748 = vor.u32 %v744, %v747
      %v749 = vrot.slane %v748, 4
      %v751 = vshll.u32 %v714, 16
      %v753 = vrot.slane %v751, 5
      %v754 = vsel %vm273, %v749, %v753
      %v756 = vshrl.u32 %v715, 16
      %v758 = vrot.slane %v756, 4
      %v759 = vshll.u32 %v715, 16
      %v761 = vrot.slane %v759, 5
      %v762 = vor.u32 %v758, %v761
      %v763 = vrot.slane %v762, 4
      %v765 = vshll.u32 %v716, 16
      %v767 = vrot.slane %v765, 5
      %v768 = vsel %vm273, %v763, %v767
      %v770 = vshrl.u32 %v717, 16
      %v772 = vrot.slane %v770, 4
      %v773 = vshll.u32 %v717, 16
      %v775 = vrot.slane %v773, 5
      %v776 = vor.u32 %v772, %v775
      %v777 = vrot.slane %v776, 4
      %v779 = vshll.u32 %v718, 16
      %v781 = vrot.slane %v779, 5
      %v782 = vsel %vm273, %v777, %v781
      %v784 = vshrl.u32 %v719, 16
      %v786 = vrot.slane %v784, 4
      %v787 = vshll.u32 %v719, 16
      %v789 = vrot.slane %v787, 5
      %v790 = vor.u32 %v786, %v789
      %v791 = vrot.slane %v790, 4
      %v793 = vshll.u32 %v720, 16
      %v795 = vrot.slane %v793, 5
      %v796 = vsel %vm273, %v791, %v795
      %v798 = vshrl.u32 %v721, 16
      %v800 = vrot.slane %v798, 4
      %v801 = vshll.u32 %v721, 16
      %v803 = vrot.slane %v801, 5
      %v804 = vor.u32 %v800, %v803
      %v805 = vrot.slane %v804, 4
      %v807 = vshll.u32 %v722, 16
      %v809 = vrot.slane %v807, 5
      %v810 = vsel %vm273, %v805, %v809
      %v812 = vshrl.u32 %v723, 16
      %v814 = vrot.slane %v812, 4
      %v815 = vshll.u32 %v723, 16
      %v817 = vrot.slane %v815, 5
      %v818 = vor.u32 %v814, %v817
      %v819 = vrot.slane %v818, 4
      %v821 = vshll.u32 %v724, 16
      %v823 = vrot.slane %v821, 5
      %v824 = vsel %vm273, %v819, %v823
      %v826 = vshrl.u32 %v725, 16
      %v828 = vrot.slane %v826, 4
      %v829 = vshll.u32 %v725, 16
      %v831 = vrot.slane %v829, 5
      %v832 = vor.u32 %v828, %v831
      %v833 = vrot.slane %v832, 4
      %v835 = vshll.u32 %v726, 16
      %v837 = vrot.slane %v835, 5
      %v838 = vsel %vm273, %v833, %v837
      %s839 = scalar_lea.vmem %s1, 24
      %v840 = vld [vmem:[%s839] sm:$0xf]
      %v841 = vld [vmem:[%s839 + $0x4] sm:$0xf]
      %v842 = vunpack.c.l.b16 %v740
      %v843 = vunpack.c.l.b16 %v754
      %v844 = vunpack.c.l.b16 %v768
      %v845 = vunpack.c.l.b16 %v782
      %v846 = vunpack.c.l.b16 %v796
      %v847 = vunpack.c.l.b16 %v810
      %v848 = vunpack.c.l.b16 %v824
      %v849 = vunpack.c.l.b16 %v838
      %v850 = vpack.c.b16 %v843, %v842
      %v851 = vpack.c.b16 %v845, %v844
      %v852 = vpack.c.b16 %v847, %v846
      %v853 = vpack.c.b16 %v849, %v848
      %v856 = vunpack.c.l.b16 %v840
      %v857 = vunpack.c.l.b16 %v841
      %v858 = vpack.c.b16 %v857, %v856
      %v861 = vsel %vm407, %v850, 0
      %v864 = vsel %vm407, %v851, 0
      %v867 = vsel %vm407, %v852, 0
      %v870 = vsel %vm407, %v853, 0
      %872 = vmatprep.subr.bf16.mxu0 0
      %873 = vmatpush1.bf16.msra.mxu0 0
      %874 = vmatprep.subr.bf16.mxu0 0
      %875 = vmatpush1.bf16.msra.mxu0 0
      %876 = vmatprep.subr.bf16.mxu0 0
      %877 = vmatpush1.bf16.msra.mxu0 0
      %878 = vmatprep.subr.bf16.mxu0 0
      %879 = vmatpush1.bf16.msra.mxu0 0
      %880 = vmatprep.subr.bf16.mxu0 0
      %881 = vmatpush1.bf16.msra.mxu0 0
      %882 = vmatprep.subr.bf16.mxu0 0
      %883 = vmatpush1.bf16.msra.mxu0 0
      %884 = vmatprep.subr.bf16.mxu0 0
      %885 = vmatpush1.bf16.msra.mxu0 0
      %886 = vmatprep.subr.bf16.mxu0 0
      %887 = vmatpush1.bf16.msra.mxu0 %v858
      %888 = vmatprep.subr.bf16.mxu0 0
      %889 = vmatpush2.bf16.msra.mxu0 0
      %890 = vmatprep.subr.bf16.mxu0 0
      %891 = vmatpush2.bf16.msra.mxu0 0
      %892 = vmatprep.subr.bf16.mxu0 0
      %893 = vmatpush2.bf16.msra.mxu0 0
      %894 = vmatprep.subr.bf16.mxu0 0
      %895 = vmatpush2.bf16.msra.mxu0 0
      %896 = vmatprep.subr.bf16.mxu0 0
      %897 = vmatpush2.bf16.msra.mxu0 0
      %898 = vmatprep.subr.bf16.mxu0 0
      %899 = vmatpush2.bf16.msra.mxu0 0
      %900 = vmatprep.subr.bf16.mxu0 0
      %901 = vmatpush2.bf16.msra.mxu0 0
      %902 = vmatprep.subr.bf16.mxu0 0
      %903 = vmatpush2.bf16.msra.mxu0 0
      %904 = vmatprep.mubr.bf16.mxu0 0
      %905 = vmatmul.mubr.bf16.gmra.mxu0 %v861
      %v906 = vpop.f32.mrf.mxu0
      %v907 = vadd.f32 0.0, %v906
      %v908 = vpop.f32.mrf.mxu0
      %v909 = vpop.f32.mrf.mxu0
      %v910 = vadd.f32 0.0, %v909
      %v911 = vpop.f32.mrf.mxu0
      %912 = vmatprep.mubr.bf16.mxu0 0
      %913 = vmatmul.mubr.bf16.gmra.mxu0 %v864
      %v914 = vpop.f32.mrf.mxu0
      %v915 = vadd.f32 0.0, %v914
      %v916 = vpop.f32.mrf.mxu0
      %v917 = vpop.f32.mrf.mxu0
      %v918 = vadd.f32 0.0, %v917
      %v919 = vpop.f32.mrf.mxu0
      %920 = vmatprep.mubr.bf16.mxu0 0
      %921 = vmatmul.mubr.bf16.gmra.mxu0 %v867
      %v922 = vpop.f32.mrf.mxu0
      %v923 = vadd.f32 0.0, %v922
      %v924 = vpop.f32.mrf.mxu0
      %v925 = vpop.f32.mrf.mxu0
      %v926 = vadd.f32 0.0, %v925
      %v927 = vpop.f32.mrf.mxu0
      %928 = vmatprep.mubr.bf16.mxu0 0
      %929 = vmatmul.mubr.bf16.gmra.mxu0 %v870
      %v930 = vpop.f32.mrf.mxu0
      %v931 = vadd.f32 0.0, %v930
      %v932 = vpop.f32.mrf.mxu0
      %v933 = vpop.f32.mrf.mxu0
      %v934 = vadd.f32 0.0, %v933
      %v935 = vpop.f32.mrf.mxu0
      %936 = vdwg.mxu0
      %v937 = vadd.f32 %v703, %v907
      %v938 = vadd.f32 %v704, %v910
      %v939 = vadd.f32 %v705, %v915
      %v940 = vadd.f32 %v706, %v918
      %v941 = vadd.f32 %v707, %v923
      %v942 = vadd.f32 %v708, %v926
      %v943 = vadd.f32 %v709, %v931
      %v944 = vadd.f32 %v710, %v934
      %v945 = vld [vmem:[%s4] sm:$0x1]
      %v946 = vlaneseq
      %v947 = vshrl.u32 %v946, 7
      %v948 = vsub.s32 0, %v947
      %v949 = vrot.slane %v945, %v948
      %v950 = vmul.f32 %v937, %v949
      %v951 = vmul.f32 %v938, %v949
      %v952 = vmul.f32 %v939, %v949
      %v953 = vmul.f32 %v940, %v949
      %v954 = vmul.f32 %v941, %v949
      %v955 = vmul.f32 %v942, %v949
      %v956 = vmul.f32 %v943, %v949
      %v957 = vmul.f32 %v944, %v949
      %v958 = vld [vmem:[%s5] sm:$0x1]
      %v959 = vlaneseq
      %v960 = vshrl.u32 %v959, 7
      %v961 = vsub.s32 0, %v960
      %v962 = vrot.slane %v958, %v961
      %v963 = vadd.f32 %v950, %v962
      %v964 = vadd.f32 %v951, %v962
      %v965 = vadd.f32 %v952, %v962
      %v966 = vadd.f32 %v953, %v962
      %v967 = vadd.f32 %v954, %v962
      %v968 = vadd.f32 %v955, %v962
      %v969 = vadd.f32 %v956, %v962
      %v970 = vadd.f32 %v957, %v962
      %v971 = vmax.f32 %v963, 0.0
      %v972 = vmax.f32 %v964, 0.0
      %v973 = vmax.f32 %v965, 0.0
      %v974 = vmax.f32 %v966, 0.0
      %v975 = vmax.f32 %v967, 0.0
      %v976 = vmax.f32 %v968, 0.0
      %v977 = vmax.f32 %v969, 0.0
      %v978 = vmax.f32 %v970, 0.0
      %979 = vst [vmem:[#allocation2] sm:$0xff] 0.0
      %980 = vst [vmem:[#allocation2 + $0x8] sm:$0x3] 0.0
      %s981 = scalar_lea.vmem [#allocation2], 144
      %982 = vst [vmem:[%s981] sm:$0xff] 0.0
      %983 = vst [vmem:[%s981 + $0x8] sm:$0x3] 0.0
      %s984 = scalar_lea.vmem [#allocation2], 16
      %985 = vst [vmem:[%s984] sm:$0x1] 0.0
      %986 = vst [vmem:[%s984 + $0x10] sm:$0x1] 0.0
      %987 = vst [vmem:[%s984 + $0x20] sm:$0x1] 0.0
      %988 = vst [vmem:[%s984 + $0x30] sm:$0x1] 0.0
      %989 = vst [vmem:[%s984 + $0x40] sm:$0x1] 0.0
      %990 = vst [vmem:[%s984 + $0x50] sm:$0x1] 0.0
      %991 = vst [vmem:[%s984 + $0x60] sm:$0x1] 0.0
      %992 = vst [vmem:[%s984 + $0x70] sm:$0x1] 0.0
      %993 = vst [vmem:[%s984 + $0x9] sm:$0x1] 0.0
      %994 = vst [vmem:[%s984 + $0x19] sm:$0x1] 0.0
      %995 = vst [vmem:[%s984 + $0x29] sm:$0x1] 0.0
      %996 = vst [vmem:[%s984 + $0x39] sm:$0x1] 0.0
      %997 = vst [vmem:[%s984 + $0x49] sm:$0x1] 0.0
      %998 = vst [vmem:[%s984 + $0x59] sm:$0x1] 0.0
      %999 = vst [vmem:[%s984 + $0x69] sm:$0x1] 0.0
      %1000 = vst [vmem:[%s984 + $0x79] sm:$0x1] 0.0
      %1001 = vst [vmem:[%s984 + $0x1] sm:$0xff] %v971
      %1002 = vst [vmem:[%s984 + $0x11] sm:$0xff] %v972
      %1003 = vst [vmem:[%s984 + $0x21] sm:$0xff] %v973
      %1004 = vst [vmem:[%s984 + $0x31] sm:$0xff] %v974
      %1005 = vst [vmem:[%s984 + $0x41] sm:$0xff] %v975
      %1006 = vst [vmem:[%s984 + $0x51] sm:$0xff] %v976
      %1007 = vst [vmem:[%s984 + $0x61] sm:$0xff] %v977
      %1008 = vst [vmem:[%s984 + $0x71] sm:$0xff] %v978
      %v1009 = vld [vmem:[#allocation2] sm:$0xff]
      %v1010 = vld [vmem:[#allocation2 + $0x10] sm:$0xff]
      %v1011 = vld [vmem:[#allocation2 + $0x20] sm:$0xff]
      %v1012 = vld [vmem:[#allocation2 + $0x30] sm:$0xff]
      %v1013 = vld [vmem:[#allocation2 + $0x40] sm:$0xff]
      %v1014 = vld [vmem:[#allocation2 + $0x50] sm:$0xff]
      %v1015 = vld [vmem:[#allocation2 + $0x60] sm:$0xff]
      %v1016 = vld [vmem:[#allocation2 + $0x70] sm:$0xff]
      %v1017 = vpack.c.bf16 %v1010, %v1009
      %v1018 = vpack.c.bf16 %v1012, %v1011
      %v1019 = vpack.c.bf16 %v1014, %v1013
      %v1020 = vpack.c.bf16 %v1016, %v1015
      %v1021 = vld [vmem:[%s2] sm:$0xf]
      %v1022 = vld [vmem:[%s2 + $0x4] sm:$0xf]
      %v1023 = vld [vmem:[%s2 + $0x8] sm:$0xf]
      %v1024 = vld [vmem:[%s2 + $0xc] sm:$0xf]
      %v1025 = vld [vmem:[%s2 + $0x10] sm:$0xf]
      %v1026 = vld [vmem:[%s2 + $0x14] sm:$0xf]
      %v1027 = vld [vmem:[%s2 + $0x18] sm:$0xf]
      %v1028 = vld [vmem:[%s2 + $0x1c] sm:$0xf]
      %v1029 = vld [vmem:[%s2 + $0x20] sm:$0xf]
      %v1030 = vld [vmem:[%s2 + $0x24] sm:$0xf]
      %v1031 = vld [vmem:[%s2 + $0x28] sm:$0xf]
      %v1032 = vld [vmem:[%s2 + $0x2c] sm:$0xf]
      %v1033 = vld [vmem:[%s2 + $0x30] sm:$0xf]
      %v1034 = vld [vmem:[%s2 + $0x34] sm:$0xf]
      %v1035 = vld [vmem:[%s2 + $0x38] sm:$0xf]
      %v1036 = vld [vmem:[%s2 + $0x3c] sm:$0xf]
      %v1037 = vld [vmem:[#allocation2 + $0x1] sm:$0xff]
      %v1038 = vld [vmem:[#allocation2 + $0x11] sm:$0xff]
      %v1039 = vld [vmem:[#allocation2 + $0x21] sm:$0xff]
      %v1040 = vld [vmem:[#allocation2 + $0x31] sm:$0xff]
      %v1041 = vld [vmem:[#allocation2 + $0x41] sm:$0xff]
      %v1042 = vld [vmem:[#allocation2 + $0x51] sm:$0xff]
      %v1043 = vld [vmem:[#allocation2 + $0x61] sm:$0xff]
      %v1044 = vld [vmem:[#allocation2 + $0x71] sm:$0xff]
      %v1045 = vpack.c.bf16 %v1038, %v1037
      %v1046 = vpack.c.bf16 %v1040, %v1039
      %v1047 = vpack.c.bf16 %v1042, %v1041
      %v1048 = vpack.c.bf16 %v1044, %v1043
      %s1049 = scalar_lea.vmem %s2, 64
      %v1050 = vld [vmem:[%s1049] sm:$0xf]
      %v1051 = vld [vmem:[%s1049 + $0x4] sm:$0xf]
      %v1052 = vld [vmem:[%s1049 + $0x8] sm:$0xf]
      %v1053 = vld [vmem:[%s1049 + $0xc] sm:$0xf]
      %v1054 = vld [vmem:[%s1049 + $0x10] sm:$0xf]
      %v1055 = vld [vmem:[%s1049 + $0x14] sm:$0xf]
      %v1056 = vld [vmem:[%s1049 + $0x18] sm:$0xf]
      %v1057 = vld [vmem:[%s1049 + $0x1c] sm:$0xf]
      %v1058 = vld [vmem:[%s1049 + $0x20] sm:$0xf]
      %v1059 = vld [vmem:[%s1049 + $0x24] sm:$0xf]
      %v1060 = vld [vmem:[%s1049 + $0x28] sm:$0xf]
      %v1061 = vld [vmem:[%s1049 + $0x2c] sm:$0xf]
      %v1062 = vld [vmem:[%s1049 + $0x30] sm:$0xf]
      %v1063 = vld [vmem:[%s1049 + $0x34] sm:$0xf]
      %v1064 = vld [vmem:[%s1049 + $0x38] sm:$0xf]
      %v1065 = vld [vmem:[%s1049 + $0x3c] sm:$0xf]
      %v1082 = vunpack.c.l.b16 %v1050
      %v1083 = vunpack.c.l.b16 %v1051
      %v1084 = vunpack.c.l.b16 %v1052
      %v1085 = vunpack.c.l.b16 %v1053
      %v1086 = vunpack.c.l.b16 %v1054
      %v1087 = vunpack.c.l.b16 %v1055
      %v1088 = vunpack.c.l.b16 %v1056
      %v1089 = vunpack.c.l.b16 %v1057
      %v1090 = vunpack.c.l.b16 %v1058
      %v1091 = vunpack.c.l.b16 %v1059
      %v1092 = vunpack.c.l.b16 %v1060
      %v1093 = vunpack.c.l.b16 %v1061
      %v1094 = vunpack.c.l.b16 %v1062
      %v1095 = vunpack.c.l.b16 %v1063
      %v1096 = vunpack.c.l.b16 %v1064
      %v1097 = vunpack.c.l.b16 %v1065
      %v1098 = vpack.c.b16 %v1083, %v1082
      %v1099 = vpack.c.b16 %v1085, %v1084
      %v1100 = vpack.c.b16 %v1087, %v1086
      %v1101 = vpack.c.b16 %v1089, %v1088
      %v1102 = vpack.c.b16 %v1091, %v1090
      %v1103 = vpack.c.b16 %v1093, %v1092
      %v1104 = vpack.c.b16 %v1095, %v1094
      %v1105 = vpack.c.b16 %v1097, %v1096
      %1114 = vmatprep.subr.bf16.mxu0 0
      %1115 = vmatpush1.bf16.msra.mxu0 %v1105
      %1116 = vmatprep.subr.bf16.mxu0 0
      %1117 = vmatpush1.bf16.msra.mxu0 %v1104
      %1118 = vmatprep.subr.bf16.mxu0 0
      %1119 = vmatpush1.bf16.msra.mxu0 %v1103
      %1120 = vmatprep.subr.bf16.mxu0 0
      %1121 = vmatpush1.bf16.msra.mxu0 %v1102
      %1122 = vmatprep.subr.bf16.mxu0 0
      %1123 = vmatpush1.bf16.msra.mxu0 %v1101
      %1124 = vmatprep.subr.bf16.mxu0 0
      %1125 = vmatpush1.bf16.msra.mxu0 %v1100
      %1126 = vmatprep.subr.bf16.mxu0 0
      %1127 = vmatpush1.bf16.msra.mxu0 %v1099
      %1128 = vmatprep.subr.bf16.mxu0 0
      %1129 = vmatpush1.bf16.msra.mxu0 %v1098
      %1130 = vmatprep.subr.bf16.mxu0 0
      %1131 = vmatpush2.bf16.msra.mxu0 0
      %1132 = vmatprep.subr.bf16.mxu0 0
      %1133 = vmatpush2.bf16.msra.mxu0 0
      %1134 = vmatprep.subr.bf16.mxu0 0
      %1135 = vmatpush2.bf16.msra.mxu0 0
      %1136 = vmatprep.subr.bf16.mxu0 0
      %1137 = vmatpush2.bf16.msra.mxu0 0
      %1138 = vmatprep.subr.bf16.mxu0 0
      %1139 = vmatpush2.bf16.msra.mxu0 0
      %1140 = vmatprep.subr.bf16.mxu0 0
      %1141 = vmatpush2.bf16.msra.mxu0 0
      %1142 = vmatprep.subr.bf16.mxu0 0
      %1143 = vmatpush2.bf16.msra.mxu0 0
      %1144 = vmatprep.subr.bf16.mxu0 0
      %1145 = vmatpush2.bf16.msra.mxu0 0
      %1146 = vmatprep.mubr.bf16.mxu0 0
      %1147 = vmatmul.mubr.bf16.gmra.mxu0 %v1045
      %v1148 = vpop.f32.mrf.mxu0
      %v1149 = vadd.f32 0.0, %v1148
      %v1150 = vpop.f32.mrf.mxu0
      %v1151 = vpop.f32.mrf.mxu0
      %v1152 = vadd.f32 0.0, %v1151
      %v1153 = vpop.f32.mrf.mxu0
      %1154 = vmatprep.mubr.bf16.mxu0 0
      %1155 = vmatmul.mubr.bf16.gmra.mxu0 %v1046
      %v1156 = vpop.f32.mrf.mxu0
      %v1157 = vadd.f32 0.0, %v1156
      %v1158 = vpop.f32.mrf.mxu0
      %v1159 = vpop.f32.mrf.mxu0
      %v1160 = vadd.f32 0.0, %v1159
      %v1161 = vpop.f32.mrf.mxu0
      %1162 = vmatprep.mubr.bf16.mxu0 0
      %1163 = vmatmul.mubr.bf16.gmra.mxu0 %v1047
      %v1164 = vpop.f32.mrf.mxu0
      %v1165 = vadd.f32 0.0, %v1164
      %v1166 = vpop.f32.mrf.mxu0
      %v1167 = vpop.f32.mrf.mxu0
      %v1168 = vadd.f32 0.0, %v1167
      %v1169 = vpop.f32.mrf.mxu0
      %1170 = vmatprep.mubr.bf16.mxu0 0
      %1171 = vmatmul.mubr.bf16.gmra.mxu0 %v1048
      %v1172 = vpop.f32.mrf.mxu0
      %v1173 = vadd.f32 0.0, %v1172
      %v1174 = vpop.f32.mrf.mxu0
      %v1175 = vpop.f32.mrf.mxu0
      %v1176 = vadd.f32 0.0, %v1175
      %v1177 = vpop.f32.mrf.mxu0
      %1178 = vdwg.mxu0
      %v1195 = vunpack.c.l.b16 %v1021
      %v1196 = vunpack.c.l.b16 %v1022
      %v1197 = vunpack.c.l.b16 %v1023
      %v1198 = vunpack.c.l.b16 %v1024
      %v1199 = vunpack.c.l.b16 %v1025
      %v1200 = vunpack.c.l.b16 %v1026
      %v1201 = vunpack.c.l.b16 %v1027
      %v1202 = vunpack.c.l.b16 %v1028
      %v1203 = vunpack.c.l.b16 %v1029
      %v1204 = vunpack.c.l.b16 %v1030
      %v1205 = vunpack.c.l.b16 %v1031
      %v1206 = vunpack.c.l.b16 %v1032
      %v1207 = vunpack.c.l.b16 %v1033
      %v1208 = vunpack.c.l.b16 %v1034
      %v1209 = vunpack.c.l.b16 %v1035
      %v1210 = vunpack.c.l.b16 %v1036
      %v1211 = vpack.c.b16 %v1196, %v1195
      %v1212 = vpack.c.b16 %v1198, %v1197
      %v1213 = vpack.c.b16 %v1200, %v1199
      %v1214 = vpack.c.b16 %v1202, %v1201
      %v1215 = vpack.c.b16 %v1204, %v1203
      %v1216 = vpack.c.b16 %v1206, %v1205
      %v1217 = vpack.c.b16 %v1208, %v1207
      %v1218 = vpack.c.b16 %v1210, %v1209
      %1227 = vmatprep.subr.bf16.mxu0 0
      %1228 = vmatpush1.bf16.msra.mxu0 %v1218
      %1229 = vmatprep.subr.bf16.mxu0 0
      %1230 = vmatpush1.bf16.msra.mxu0 %v1217
      %1231 = vmatprep.subr.bf16.mxu0 0
      %1232 = vmatpush1.bf16.msra.mxu0 %v1216
      %1233 = vmatprep.subr.bf16.mxu0 0
      %1234 = vmatpush1.bf16.msra.mxu0 %v1215
      %1235 = vmatprep.subr.bf16.mxu0 0
      %1236 = vmatpush1.bf16.msra.mxu0 %v1214
      %1237 = vmatprep.subr.bf16.mxu0 0
      %1238 = vmatpush1.bf16.msra.mxu0 %v1213
      %1239 = vmatprep.subr.bf16.mxu0 0
      %1240 = vmatpush1.bf16.msra.mxu0 %v1212
      %1241 = vmatprep.subr.bf16.mxu0 0
      %1242 = vmatpush1.bf16.msra.mxu0 %v1211
      %1243 = vmatprep.subr.bf16.mxu0 0
      %1244 = vmatpush2.bf16.msra.mxu0 0
      %1245 = vmatprep.subr.bf16.mxu0 0
      %1246 = vmatpush2.bf16.msra.mxu0 0
      %1247 = vmatprep.subr.bf16.mxu0 0
      %1248 = vmatpush2.bf16.msra.mxu0 0
      %1249 = vmatprep.subr.bf16.mxu0 0
      %1250 = vmatpush2.bf16.msra.mxu0 0
      %1251 = vmatprep.subr.bf16.mxu0 0
      %1252 = vmatpush2.bf16.msra.mxu0 0
      %1253 = vmatprep.subr.bf16.mxu0 0
      %1254 = vmatpush2.bf16.msra.mxu0 0
      %1255 = vmatprep.subr.bf16.mxu0 0
      %1256 = vmatpush2.bf16.msra.mxu0 0
      %1257 = vmatprep.subr.bf16.mxu0 0
      %1258 = vmatpush2.bf16.msra.mxu0 0
      %1259 = vmatprep.mubr.bf16.mxu0 0
      %1260 = vmatmul.mubr.bf16.gmra.mxu0 %v1017
      %v1261 = vpop.f32.mrf.mxu0
      %v1262 = vadd.f32 %v1149, %v1261
      %v1263 = vpop.f32.mrf.mxu0
      %v1264 = vpop.f32.mrf.mxu0
      %v1265 = vadd.f32 %v1152, %v1264
      %v1266 = vpop.f32.mrf.mxu0
      %1267 = vmatprep.mubr.bf16.mxu0 0
      %1268 = vmatmul.mubr.bf16.gmra.mxu0 %v1018
      %v1269 = vpop.f32.mrf.mxu0
      %v1270 = vadd.f32 %v1157, %v1269
      %v1271 = vpop.f32.mrf.mxu0
      %v1272 = vpop.f32.mrf.mxu0
      %v1273 = vadd.f32 %v1160, %v1272
      %v1274 = vpop.f32.mrf.mxu0
      %1275 = vmatprep.mubr.bf16.mxu0 0
      %1276 = vmatmul.mubr.bf16.gmra.mxu0 %v1019
      %v1277 = vpop.f32.mrf.mxu0
      %v1278 = vadd.f32 %v1165, %v1277
      %v1279 = vpop.f32.mrf.mxu0
      %v1280 = vpop.f32.mrf.mxu0
      %v1281 = vadd.f32 %v1168, %v1280
      %v1282 = vpop.f32.mrf.mxu0
      %1283 = vmatprep.mubr.bf16.mxu0 0
      %1284 = vmatmul.mubr.bf16.gmra.mxu0 %v1020
      %v1285 = vpop.f32.mrf.mxu0
      %v1286 = vadd.f32 %v1173, %v1285
      %v1287 = vpop.f32.mrf.mxu0
      %v1288 = vpop.f32.mrf.mxu0
      %v1289 = vadd.f32 %v1176, %v1288
      %v1290 = vpop.f32.mrf.mxu0
      %1291 = vdwg.mxu0
      %v1292 = vld [vmem:[#allocation2 + $0x2] sm:$0xff]
      %v1293 = vld [vmem:[#allocation2 + $0x12] sm:$0xff]
      %v1294 = vld [vmem:[#allocation2 + $0x22] sm:$0xff]
      %v1295 = vld [vmem:[#allocation2 + $0x32] sm:$0xff]
      %v1296 = vld [vmem:[#allocation2 + $0x42] sm:$0xff]
      %v1297 = vld [vmem:[#allocation2 + $0x52] sm:$0xff]
      %v1298 = vld [vmem:[#allocation2 + $0x62] sm:$0xff]
      %v1299 = vld [vmem:[#allocation2 + $0x72] sm:$0xff]
      %v1300 = vpack.c.bf16 %v1293, %v1292
      %v1301 = vpack.c.bf16 %v1295, %v1294
      %v1302 = vpack.c.bf16 %v1297, %v1296
      %v1303 = vpack.c.bf16 %v1299, %v1298
      %s1304 = scalar_lea.vmem %s2, 128
      %v1305 = vld [vmem:[%s1304] sm:$0xf]
      %v1306 = vld [vmem:[%s1304 + $0x4] sm:$0xf]
      %v1307 = vld [vmem:[%s1304 + $0x8] sm:$0xf]
      %v1308 = vld [vmem:[%s1304 + $0xc] sm:$0xf]
      %v1309 = vld [vmem:[%s1304 + $0x10] sm:$0xf]
      %v1310 = vld [vmem:[%s1304 + $0x14] sm:$0xf]
      %v1311 = vld [vmem:[%s1304 + $0x18] sm:$0xf]
      %v1312 = vld [vmem:[%s1304 + $0x1c] sm:$0xf]
      %v1313 = vld [vmem:[%s1304 + $0x20] sm:$0xf]
      %v1314 = vld [vmem:[%s1304 + $0x24] sm:$0xf]
      %v1315 = vld [vmem:[%s1304 + $0x28] sm:$0xf]
      %v1316 = vld [vmem:[%s1304 + $0x2c] sm:$0xf]
      %v1317 = vld [vmem:[%s1304 + $0x30] sm:$0xf]
      %v1318 = vld [vmem:[%s1304 + $0x34] sm:$0xf]
      %v1319 = vld [vmem:[%s1304 + $0x38] sm:$0xf]
      %v1320 = vld [vmem:[%s1304 + $0x3c] sm:$0xf]
      %v1337 = vunpack.c.l.b16 %v1305
      %v1338 = vunpack.c.l.b16 %v1306
      %v1339 = vunpack.c.l.b16 %v1307
      %v1340 = vunpack.c.l.b16 %v1308
      %v1341 = vunpack.c.l.b16 %v1309
      %v1342 = vunpack.c.l.b16 %v1310
      %v1343 = vunpack.c.l.b16 %v1311
      %v1344 = vunpack.c.l.b16 %v1312
      %v1345 = vunpack.c.l.b16 %v1313
      %v1346 = vunpack.c.l.b16 %v1314
      %v1347 = vunpack.c.l.b16 %v1315
      %v1348 = vunpack.c.l.b16 %v1316
      %v1349 = vunpack.c.l.b16 %v1317
      %v1350 = vunpack.c.l.b16 %v1318
      %v1351 = vunpack.c.l.b16 %v1319
      %v1352 = vunpack.c.l.b16 %v1320
      %v1353 = vpack.c.b16 %v1338, %v1337
      %v1354 = vpack.c.b16 %v1340, %v1339
      %v1355 = vpack.c.b16 %v1342, %v1341
      %v1356 = vpack.c.b16 %v1344, %v1343
      %v1357 = vpack.c.b16 %v1346, %v1345
      %v1358 = vpack.c.b16 %v1348, %v1347
      %v1359 = vpack.c.b16 %v1350, %v1349
      %v1360 = vpack.c.b16 %v1352, %v1351
      %1369 = vmatprep.subr.bf16.mxu0 0
      %1370 = vmatpush1.bf16.msra.mxu0 %v1360
      %1371 = vmatprep.subr.bf16.mxu0 0
      %1372 = vmatpush1.bf16.msra.mxu0 %v1359
      %1373 = vmatprep.subr.bf16.mxu0 0
      %1374 = vmatpush1.bf16.msra.mxu0 %v1358
      %1375 = vmatprep.subr.bf16.mxu0 0
      %1376 = vmatpush1.bf16.msra.mxu0 %v1357
      %1377 = vmatprep.subr.bf16.mxu0 0
      %1378 = vmatpush1.bf16.msra.mxu0 %v1356
      %1379 = vmatprep.subr.bf16.mxu0 0
      %1380 = vmatpush1.bf16.msra.mxu0 %v1355
      %1381 = vmatprep.subr.bf16.mxu0 0
      %1382 = vmatpush1.bf16.msra.mxu0 %v1354
      %1383 = vmatprep.subr.bf16.mxu0 0
      %1384 = vmatpush1.bf16.msra.mxu0 %v1353
      %1385 = vmatprep.subr.bf16.mxu0 0
      %1386 = vmatpush2.bf16.msra.mxu0 0
      %1387 = vmatprep.subr.bf16.mxu0 0
      %1388 = vmatpush2.bf16.msra.mxu0 0
      %1389 = vmatprep.subr.bf16.mxu0 0
      %1390 = vmatpush2.bf16.msra.mxu0 0
      %1391 = vmatprep.subr.bf16.mxu0 0
      %1392 = vmatpush2.bf16.msra.mxu0 0
      %1393 = vmatprep.subr.bf16.mxu0 0
      %1394 = vmatpush2.bf16.msra.mxu0 0
      %1395 = vmatprep.subr.bf16.mxu0 0
      %1396 = vmatpush2.bf16.msra.mxu0 0
      %1397 = vmatprep.subr.bf16.mxu0 0
      %1398 = vmatpush2.bf16.msra.mxu0 0
      %1399 = vmatprep.subr.bf16.mxu0 0
      %1400 = vmatpush2.bf16.msra.mxu0 0
      %1401 = vmatprep.mubr.bf16.mxu0 0
      %1402 = vmatmul.mubr.bf16.gmra.mxu0 %v1300
      %v1403 = vpop.f32.mrf.mxu0
      %v1404 = vadd.f32 0.0, %v1403
      %v1405 = vpop.f32.mrf.mxu0
      %v1406 = vpop.f32.mrf.mxu0
      %v1407 = vadd.f32 0.0, %v1406
      %v1408 = vpop.f32.mrf.mxu0
      %1409 = vmatprep.mubr.bf16.mxu0 0
      %1410 = vmatmul.mubr.bf16.gmra.mxu0 %v1301
      %v1411 = vpop.f32.mrf.mxu0
      %v1412 = vadd.f32 0.0, %v1411
      %v1413 = vpop.f32.mrf.mxu0
      %v1414 = vpop.f32.mrf.mxu0
      %v1415 = vadd.f32 0.0, %v1414
      %v1416 = vpop.f32.mrf.mxu0
      %1417 = vmatprep.mubr.bf16.mxu0 0
      %1418 = vmatmul.mubr.bf16.gmra.mxu0 %v1302
      %v1419 = vpop.f32.mrf.mxu0
      %v1420 = vadd.f32 0.0, %v1419
      %v1421 = vpop.f32.mrf.mxu0
      %v1422 = vpop.f32.mrf.mxu0
      %v1423 = vadd.f32 0.0, %v1422
      %v1424 = vpop.f32.mrf.mxu0
      %1425 = vmatprep.mubr.bf16.mxu0 0
      %1426 = vmatmul.mubr.bf16.gmra.mxu0 %v1303
      %v1427 = vpop.f32.mrf.mxu0
      %v1428 = vadd.f32 0.0, %v1427
      %v1429 = vpop.f32.mrf.mxu0
      %v1430 = vpop.f32.mrf.mxu0
      %v1431 = vadd.f32 0.0, %v1430
      %v1432 = vpop.f32.mrf.mxu0
      %1433 = vdwg.mxu0
      %v1434 = vadd.f32 %v1262, %v1404
      %v1435 = vadd.f32 %v1265, %v1407
      %v1436 = vadd.f32 %v1270, %v1412
      %v1437 = vadd.f32 %v1273, %v1415
      %v1438 = vadd.f32 %v1278, %v1420
      %v1439 = vadd.f32 %v1281, %v1423
      %v1440 = vadd.f32 %v1286, %v1428
      %v1441 = vadd.f32 %v1289, %v1431
      %v1442 = vld [vmem:[%s984] sm:$0xff]
      %v1443 = vld [vmem:[%s984 + $0x10] sm:$0xff]
      %v1444 = vld [vmem:[%s984 + $0x20] sm:$0xff]
      %v1445 = vld [vmem:[%s984 + $0x30] sm:$0xff]
      %v1446 = vld [vmem:[%s984 + $0x40] sm:$0xff]
      %v1447 = vld [vmem:[%s984 + $0x50] sm:$0xff]
      %v1448 = vld [vmem:[%s984 + $0x60] sm:$0xff]
      %v1449 = vld [vmem:[%s984 + $0x70] sm:$0xff]
      %v1450 = vpack.c.bf16 %v1443, %v1442
      %v1451 = vpack.c.bf16 %v1445, %v1444
      %v1452 = vpack.c.bf16 %v1447, %v1446
      %v1453 = vpack.c.bf16 %v1449, %v1448
      %s1454 = scalar_lea.vmem %s2, 192
      %v1455 = vld [vmem:[%s1454] sm:$0xf]
      %v1456 = vld [vmem:[%s1454 + $0x4] sm:$0xf]
      %v1457 = vld [vmem:[%s1454 + $0x8] sm:$0xf]
      %v1458 = vld [vmem:[%s1454 + $0xc] sm:$0xf]
      %v1459 = vld [vmem:[%s1454 + $0x10] sm:$0xf]
      %v1460 = vld [vmem:[%s1454 + $0x14] sm:$0xf]
      %v1461 = vld [vmem:[%s1454 + $0x18] sm:$0xf]
      %v1462 = vld [vmem:[%s1454 + $0x1c] sm:$0xf]
      %v1463 = vld [vmem:[%s1454 + $0x20] sm:$0xf]
      %v1464 = vld [vmem:[%s1454 + $0x24] sm:$0xf]
      %v1465 = vld [vmem:[%s1454 + $0x28] sm:$0xf]
      %v1466 = vld [vmem:[%s1454 + $0x2c] sm:$0xf]
      %v1467 = vld [vmem:[%s1454 + $0x30] sm:$0xf]
      %v1468 = vld [vmem:[%s1454 + $0x34] sm:$0xf]
      %v1469 = vld [vmem:[%s1454 + $0x38] sm:$0xf]
      %v1470 = vld [vmem:[%s1454 + $0x3c] sm:$0xf]
      %v1487 = vunpack.c.l.b16 %v1455
      %v1488 = vunpack.c.l.b16 %v1456
      %v1489 = vunpack.c.l.b16 %v1457
      %v1490 = vunpack.c.l.b16 %v1458
      %v1491 = vunpack.c.l.b16 %v1459
      %v1492 = vunpack.c.l.b16 %v1460
      %v1493 = vunpack.c.l.b16 %v1461
      %v1494 = vunpack.c.l.b16 %v1462
      %v1495 = vunpack.c.l.b16 %v1463
      %v1496 = vunpack.c.l.b16 %v1464
      %v1497 = vunpack.c.l.b16 %v1465
      %v1498 = vunpack.c.l.b16 %v1466
      %v1499 = vunpack.c.l.b16 %v1467
      %v1500 = vunpack.c.l.b16 %v1468
      %v1501 = vunpack.c.l.b16 %v1469
      %v1502 = vunpack.c.l.b16 %v1470
      %v1503 = vpack.c.b16 %v1488, %v1487
      %v1504 = vpack.c.b16 %v1490, %v1489
      %v1505 = vpack.c.b16 %v1492, %v1491
      %v1506 = vpack.c.b16 %v1494, %v1493
      %v1507 = vpack.c.b16 %v1496, %v1495
      %v1508 = vpack.c.b16 %v1498, %v1497
      %v1509 = vpack.c.b16 %v1500, %v1499
      %v1510 = vpack.c.b16 %v1502, %v1501
      %1519 = vmatprep.subr.bf16.mxu0 0
      %1520 = vmatpush1.bf16.msra.mxu0 %v1510
      %1521 = vmatprep.subr.bf16.mxu0 0
      %1522 = vmatpush1.bf16.msra.mxu0 %v1509
      %1523 = vmatprep.subr.bf16.mxu0 0
      %1524 = vmatpush1.bf16.msra.mxu0 %v1508
      %1525 = vmatprep.subr.bf16.mxu0 0
      %1526 = vmatpush1.bf16.msra.mxu0 %v1507
      %1527 = vmatprep.subr.bf16.mxu0 0
      %1528 = vmatpush1.bf16.msra.mxu0 %v1506
      %1529 = vmatprep.subr.bf16.mxu0 0
      %1530 = vmatpush1.bf16.msra.mxu0 %v1505
      %1531 = vmatprep.subr.bf16.mxu0 0
      %1532 = vmatpush1.bf16.msra.mxu0 %v1504
      %1533 = vmatprep.subr.bf16.mxu0 0
      %1534 = vmatpush1.bf16.msra.mxu0 %v1503
      %1535 = vmatprep.subr.bf16.mxu0 0
      %1536 = vmatpush2.bf16.msra.mxu0 0
      %1537 = vmatprep.subr.bf16.mxu0 0
      %1538 = vmatpush2.bf16.msra.mxu0 0
      %1539 = vmatprep.subr.bf16.mxu0 0
      %1540 = vmatpush2.bf16.msra.mxu0 0
      %1541 = vmatprep.subr.bf16.mxu0 0
      %1542 = vmatpush2.bf16.msra.mxu0 0
      %1543 = vmatprep.subr.bf16.mxu0 0
      %1544 = vmatpush2.bf16.msra.mxu0 0
      %1545 = vmatprep.subr.bf16.mxu0 0
      %1546 = vmatpush2.bf16.msra.mxu0 0
      %1547 = vmatprep.subr.bf16.mxu0 0
      %1548 = vmatpush2.bf16.msra.mxu0 0
      %1549 = vmatprep.subr.bf16.mxu0 0
      %1550 = vmatpush2.bf16.msra.mxu0 0
      %1551 = vmatprep.mubr.bf16.mxu0 0
      %1552 = vmatmul.mubr.bf16.gmra.mxu0 %v1450
      %v1553 = vpop.f32.mrf.mxu0
      %v1554 = vadd.f32 0.0, %v1553
      %v1555 = vpop.f32.mrf.mxu0
      %v1556 = vpop.f32.mrf.mxu0
      %v1557 = vadd.f32 0.0, %v1556
      %v1558 = vpop.f32.mrf.mxu0
      %1559 = vmatprep.mubr.bf16.mxu0 0
      %1560 = vmatmul.mubr.bf16.gmra.mxu0 %v1451
      %v1561 = vpop.f32.mrf.mxu0
      %v1562 = vadd.f32 0.0, %v1561
      %v1563 = vpop.f32.mrf.mxu0
      %v1564 = vpop.f32.mrf.mxu0
      %v1565 = vadd.f32 0.0, %v1564
      %v1566 = vpop.f32.mrf.mxu0
      %1567 = vmatprep.mubr.bf16.mxu0 0
      %1568 = vmatmul.mubr.bf16.gmra.mxu0 %v1452
      %v1569 = vpop.f32.mrf.mxu0
      %v1570 = vadd.f32 0.0, %v1569
      %v1571 = vpop.f32.mrf.mxu0
      %v1572 = vpop.f32.mrf.mxu0
      %v1573 = vadd.f32 0.0, %v1572
      %v1574 = vpop.f32.mrf.mxu0
      %1575 = vmatprep.mubr.bf16.mxu0 0
      %1576 = vmatmul.mubr.bf16.gmra.mxu0 %v1453
      %v1577 = vpop.f32.mrf.mxu0
      %v1578 = vadd.f32 0.0, %v1577
      %v1579 = vpop.f32.mrf.mxu0
      %v1580 = vpop.f32.mrf.mxu0
      %v1581 = vadd.f32 0.0, %v1580
      %v1582 = vpop.f32.mrf.mxu0
      %1583 = vdwg.mxu0
      %v1584 = vadd.f32 %v1434, %v1554
      %v1585 = vadd.f32 %v1435, %v1557
      %v1586 = vadd.f32 %v1436, %v1562
      %v1587 = vadd.f32 %v1437, %v1565
      %v1588 = vadd.f32 %v1438, %v1570
      %v1589 = vadd.f32 %v1439, %v1573
      %v1590 = vadd.f32 %v1440, %v1578
      %v1591 = vadd.f32 %v1441, %v1581
      %v1592 = vld [vmem:[%s984 + $0x1] sm:$0xff]
      %v1593 = vld [vmem:[%s984 + $0x11] sm:$0xff]
      %v1594 = vld [vmem:[%s984 + $0x21] sm:$0xff]
      %v1595 = vld [vmem:[%s984 + $0x31] sm:$0xff]
      %v1596 = vld [vmem:[%s984 + $0x41] sm:$0xff]
      %v1597 = vld [vmem:[%s984 + $0x51] sm:$0xff]
      %v1598 = vld [vmem:[%s984 + $0x61] sm:$0xff]
      %v1599 = vld [vmem:[%s984 + $0x71] sm:$0xff]
      %v1600 = vpack.c.bf16 %v1593, %v1592
      %v1601 = vpack.c.bf16 %v1595, %v1594
      %v1602 = vpack.c.bf16 %v1597, %v1596
      %v1603 = vpack.c.bf16 %v1599, %v1598
      %s1604 = scalar_lea.vmem %s2, 256
      %v1605 = vld [vmem:[%s1604] sm:$0xf]
      %v1606 = vld [vmem:[%s1604 + $0x4] sm:$0xf]
      %v1607 = vld [vmem:[%s1604 + $0x8] sm:$0xf]
      %v1608 = vld [vmem:[%s1604 + $0xc] sm:$0xf]
      %v1609 = vld [vmem:[%s1604 + $0x10] sm:$0xf]
      %v1610 = vld [vmem:[%s1604 + $0x14] sm:$0xf]
      %v1611 = vld [vmem:[%s1604 + $0x18] sm:$0xf]
      %v1612 = vld [vmem:[%s1604 + $0x1c] sm:$0xf]
      %v1613 = vld [vmem:[%s1604 + $0x20] sm:$0xf]
      %v1614 = vld [vmem:[%s1604 + $0x24] sm:$0xf]
      %v1615 = vld [vmem:[%s1604 + $0x28] sm:$0xf]
      %v1616 = vld [vmem:[%s1604 + $0x2c] sm:$0xf]
      %v1617 = vld [vmem:[%s1604 + $0x30] sm:$0xf]
      %v1618 = vld [vmem:[%s1604 + $0x34] sm:$0xf]
      %v1619 = vld [vmem:[%s1604 + $0x38] sm:$0xf]
      %v1620 = vld [vmem:[%s1604 + $0x3c] sm:$0xf]
      %v1637 = vunpack.c.l.b16 %v1605
      %v1638 = vunpack.c.l.b16 %v1606
      %v1639 = vunpack.c.l.b16 %v1607
      %v1640 = vunpack.c.l.b16 %v1608
      %v1641 = vunpack.c.l.b16 %v1609
      %v1642 = vunpack.c.l.b16 %v1610
      %v1643 = vunpack.c.l.b16 %v1611
      %v1644 = vunpack.c.l.b16 %v1612
      %v1645 = vunpack.c.l.b16 %v1613
      %v1646 = vunpack.c.l.b16 %v1614
      %v1647 = vunpack.c.l.b16 %v1615
      %v1648 = vunpack.c.l.b16 %v1616
      %v1649 = vunpack.c.l.b16 %v1617
      %v1650 = vunpack.c.l.b16 %v1618
      %v1651 = vunpack.c.l.b16 %v1619
      %v1652 = vunpack.c.l.b16 %v1620
      %v1653 = vpack.c.b16 %v1638, %v1637
      %v1654 = vpack.c.b16 %v1640, %v1639
      %v1655 = vpack.c.b16 %v1642, %v1641
      %v1656 = vpack.c.b16 %v1644, %v1643
      %v1657 = vpack.c.b16 %v1646, %v1645
      %v1658 = vpack.c.b16 %v1648, %v1647
      %v1659 = vpack.c.b16 %v1650, %v1649
      %v1660 = vpack.c.b16 %v1652, %v1651
      %1669 = vmatprep.subr.bf16.mxu0 0
      %1670 = vmatpush1.bf16.msra.mxu0 %v1660
      %1671 = vmatprep.subr.bf16.mxu0 0
      %1672 = vmatpush1.bf16.msra.mxu0 %v1659
      %1673 = vmatprep.subr.bf16.mxu0 0
      %1674 = vmatpush1.bf16.msra.mxu0 %v1658
      %1675 = vmatprep.subr.bf16.mxu0 0
      %1676 = vmatpush1.bf16.msra.mxu0 %v1657
      %1677 = vmatprep.subr.bf16.mxu0 0
      %1678 = vmatpush1.bf16.msra.mxu0 %v1656
      %1679 = vmatprep.subr.bf16.mxu0 0
      %1680 = vmatpush1.bf16.msra.mxu0 %v1655
      %1681 = vmatprep.subr.bf16.mxu0 0
      %1682 = vmatpush1.bf16.msra.mxu0 %v1654
      %1683 = vmatprep.subr.bf16.mxu0 0
      %1684 = vmatpush1.bf16.msra.mxu0 %v1653
      %1685 = vmatprep.subr.bf16.mxu0 0
      %1686 = vmatpush2.bf16.msra.mxu0 0
      %1687 = vmatprep.subr.bf16.mxu0 0
      %1688 = vmatpush2.bf16.msra.mxu0 0
      %1689 = vmatprep.subr.bf16.mxu0 0
      %1690 = vmatpush2.bf16.msra.mxu0 0
      %1691 = vmatprep.subr.bf16.mxu0 0
      %1692 = vmatpush2.bf16.msra.mxu0 0
      %1693 = vmatprep.subr.bf16.mxu0 0
      %1694 = vmatpush2.bf16.msra.mxu0 0
      %1695 = vmatprep.subr.bf16.mxu0 0
      %1696 = vmatpush2.bf16.msra.mxu0 0
      %1697 = vmatprep.subr.bf16.mxu0 0
      %1698 = vmatpush2.bf16.msra.mxu0 0
      %1699 = vmatprep.subr.bf16.mxu0 0
      %1700 = vmatpush2.bf16.msra.mxu0 0
      %1701 = vmatprep.mubr.bf16.mxu0 0
      %1702 = vmatmul.mubr.bf16.gmra.mxu0 %v1600
      %v1703 = vpop.f32.mrf.mxu0
      %v1704 = vadd.f32 0.0, %v1703
      %v1705 = vpop.f32.mrf.mxu0
      %v1706 = vpop.f32.mrf.mxu0
      %v1707 = vadd.f32 0.0, %v1706
      %v1708 = vpop.f32.mrf.mxu0
      %1709 = vmatprep.mubr.bf16.mxu0 0
      %1710 = vmatmul.mubr.bf16.gmra.mxu0 %v1601
      %v1711 = vpop.f32.mrf.mxu0
      %v1712 = vadd.f32 0.0, %v1711
      %v1713 = vpop.f32.mrf.mxu0
      %v1714 = vpop.f32.mrf.mxu0
      %v1715 = vadd.f32 0.0, %v1714
      %v1716 = vpop.f32.mrf.mxu0
      %1717 = vmatprep.mubr.bf16.mxu0 0
      %1718 = vmatmul.mubr.bf16.gmra.mxu0 %v1602
      %v1719 = vpop.f32.mrf.mxu0
      %v1720 = vadd.f32 0.0, %v1719
      %v1721 = vpop.f32.mrf.mxu0
      %v1722 = vpop.f32.mrf.mxu0
      %v1723 = vadd.f32 0.0, %v1722
      %v1724 = vpop.f32.mrf.mxu0
      %1725 = vmatprep.mubr.bf16.mxu0 0
      %1726 = vmatmul.mubr.bf16.gmra.mxu0 %v1603
      %v1727 = vpop.f32.mrf.mxu0
      %v1728 = vadd.f32 0.0, %v1727
      %v1729 = vpop.f32.mrf.mxu0
      %v1730 = vpop.f32.mrf.mxu0
      %v1731 = vadd.f32 0.0, %v1730
      %v1732 = vpop.f32.mrf.mxu0
      %1733 = vdwg.mxu0
      %v1734 = vadd.f32 %v1584, %v1704
      %v1735 = vadd.f32 %v1585, %v1707
      %v1736 = vadd.f32 %v1586, %v1712
      %v1737 = vadd.f32 %v1587, %v1715
      %v1738 = vadd.f32 %v1588, %v1720
      %v1739 = vadd.f32 %v1589, %v1723
      %v1740 = vadd.f32 %v1590, %v1728
      %v1741 = vadd.f32 %v1591, %v1731
      %v1742 = vld [vmem:[%s984 + $0x2] sm:$0xff]
      %v1743 = vld [vmem:[%s984 + $0x12] sm:$0xff]
      %v1744 = vld [vmem:[%s984 + $0x22] sm:$0xff]
      %v1745 = vld [vmem:[%s984 + $0x32] sm:$0xff]
      %v1746 = vld [vmem:[%s984 + $0x42] sm:$0xff]
      %v1747 = vld [vmem:[%s984 + $0x52] sm:$0xff]
      %v1748 = vld [vmem:[%s984 + $0x62] sm:$0xff]
      %v1749 = vld [vmem:[%s984 + $0x72] sm:$0xff]
      %v1750 = vpack.c.bf16 %v1743, %v1742
      %v1751 = vpack.c.bf16 %v1745, %v1744
      %v1752 = vpack.c.bf16 %v1747, %v1746
      %v1753 = vpack.c.bf16 %v1749, %v1748
      %s1754 = scalar_lea.vmem %s2, 320
      %v1755 = vld [vmem:[%s1754] sm:$0xf]
      %v1756 = vld [vmem:[%s1754 + $0x4] sm:$0xf]
      %v1757 = vld [vmem:[%s1754 + $0x8] sm:$0xf]
      %v1758 = vld [vmem:[%s1754 + $0xc] sm:$0xf]
      %v1759 = vld [vmem:[%s1754 + $0x10] sm:$0xf]
      %v1760 = vld [vmem:[%s1754 + $0x14] sm:$0xf]
      %v1761 = vld [vmem:[%s1754 + $0x18] sm:$0xf]
      %v1762 = vld [vmem:[%s1754 + $0x1c] sm:$0xf]
      %v1763 = vld [vmem:[%s1754 + $0x20] sm:$0xf]
      %v1764 = vld [vmem:[%s1754 + $0x24] sm:$0xf]
      %v1765 = vld [vmem:[%s1754 + $0x28] sm:$0xf]
      %v1766 = vld [vmem:[%s1754 + $0x2c] sm:$0xf]
      %v1767 = vld [vmem:[%s1754 + $0x30] sm:$0xf]
      %v1768 = vld [vmem:[%s1754 + $0x34] sm:$0xf]
      %v1769 = vld [vmem:[%s1754 + $0x38] sm:$0xf]
      %v1770 = vld [vmem:[%s1754 + $0x3c] sm:$0xf]
      %v1787 = vunpack.c.l.b16 %v1755
      %v1788 = vunpack.c.l.b16 %v1756
      %v1789 = vunpack.c.l.b16 %v1757
      %v1790 = vunpack.c.l.b16 %v1758
      %v1791 = vunpack.c.l.b16 %v1759
      %v1792 = vunpack.c.l.b16 %v1760
      %v1793 = vunpack.c.l.b16 %v1761
      %v1794 = vunpack.c.l.b16 %v1762
      %v1795 = vunpack.c.l.b16 %v1763
      %v1796 = vunpack.c.l.b16 %v1764
      %v1797 = vunpack.c.l.b16 %v1765
      %v1798 = vunpack.c.l.b16 %v1766
      %v1799 = vunpack.c.l.b16 %v1767
      %v1800 = vunpack.c.l.b16 %v1768
      %v1801 = vunpack.c.l.b16 %v1769
      %v1802 = vunpack.c.l.b16 %v1770
      %v1803 = vpack.c.b16 %v1788, %v1787
      %v1804 = vpack.c.b16 %v1790, %v1789
      %v1805 = vpack.c.b16 %v1792, %v1791
      %v1806 = vpack.c.b16 %v1794, %v1793
      %v1807 = vpack.c.b16 %v1796, %v1795
      %v1808 = vpack.c.b16 %v1798, %v1797
      %v1809 = vpack.c.b16 %v1800, %v1799
      %v1810 = vpack.c.b16 %v1802, %v1801
      %1819 = vmatprep.subr.bf16.mxu0 0
      %1820 = vmatpush1.bf16.msra.mxu0 %v1810
      %1821 = vmatprep.subr.bf16.mxu0 0
      %1822 = vmatpush1.bf16.msra.mxu0 %v1809
      %1823 = vmatprep.subr.bf16.mxu0 0
      %1824 = vmatpush1.bf16.msra.mxu0 %v1808
      %1825 = vmatprep.subr.bf16.mxu0 0
      %1826 = vmatpush1.bf16.msra.mxu0 %v1807
      %1827 = vmatprep.subr.bf16.mxu0 0
      %1828 = vmatpush1.bf16.msra.mxu0 %v1806
      %1829 = vmatprep.subr.bf16.mxu0 0
      %1830 = vmatpush1.bf16.msra.mxu0 %v1805
      %1831 = vmatprep.subr.bf16.mxu0 0
      %1832 = vmatpush1.bf16.msra.mxu0 %v1804
      %1833 = vmatprep.subr.bf16.mxu0 0
      %1834 = vmatpush1.bf16.msra.mxu0 %v1803
      %1835 = vmatprep.subr.bf16.mxu0 0
      %1836 = vmatpush2.bf16.msra.mxu0 0
      %1837 = vmatprep.subr.bf16.mxu0 0
      %1838 = vmatpush2.bf16.msra.mxu0 0
      %1839 = vmatprep.subr.bf16.mxu0 0
      %1840 = vmatpush2.bf16.msra.mxu0 0
      %1841 = vmatprep.subr.bf16.mxu0 0
      %1842 = vmatpush2.bf16.msra.mxu0 0
      %1843 = vmatprep.subr.bf16.mxu0 0
      %1844 = vmatpush2.bf16.msra.mxu0 0
      %1845 = vmatprep.subr.bf16.mxu0 0
      %1846 = vmatpush2.bf16.msra.mxu0 0
      %1847 = vmatprep.subr.bf16.mxu0 0
      %1848 = vmatpush2.bf16.msra.mxu0 0
      %1849 = vmatprep.subr.bf16.mxu0 0
      %1850 = vmatpush2.bf16.msra.mxu0 0
      %1851 = vmatprep.mubr.bf16.mxu0 0
      %1852 = vmatmul.mubr.bf16.gmra.mxu0 %v1750
      %v1853 = vpop.f32.mrf.mxu0
      %v1854 = vadd.f32 0.0, %v1853
      %v1855 = vpop.f32.mrf.mxu0
      %v1856 = vpop.f32.mrf.mxu0
      %v1857 = vadd.f32 0.0, %v1856
      %v1858 = vpop.f32.mrf.mxu0
      %1859 = vmatprep.mubr.bf16.mxu0 0
      %1860 = vmatmul.mubr.bf16.gmra.mxu0 %v1751
      %v1861 = vpop.f32.mrf.mxu0
      %v1862 = vadd.f32 0.0, %v1861
      %v1863 = vpop.f32.mrf.mxu0
      %v1864 = vpop.f32.mrf.mxu0
      %v1865 = vadd.f32 0.0, %v1864
      %v1866 = vpop.f32.mrf.mxu0
      %1867 = vmatprep.mubr.bf16.mxu0 0
      %1868 = vmatmul.mubr.bf16.gmra.mxu0 %v1752
      %v1869 = vpop.f32.mrf.mxu0
      %v1870 = vadd.f32 0.0, %v1869
      %v1871 = vpop.f32.mrf.mxu0
      %v1872 = vpop.f32.mrf.mxu0
      %v1873 = vadd.f32 0.0, %v1872
      %v1874 = vpop.f32.mrf.mxu0
      %1875 = vmatprep.mubr.bf16.mxu0 0
      %1876 = vmatmul.mubr.bf16.gmra.mxu0 %v1753
      %v1877 = vpop.f32.mrf.mxu0
      %v1878 = vadd.f32 0.0, %v1877
      %v1879 = vpop.f32.mrf.mxu0
      %v1880 = vpop.f32.mrf.mxu0
      %v1881 = vadd.f32 0.0, %v1880
      %v1882 = vpop.f32.mrf.mxu0
      %1883 = vdwg.mxu0
      %v1884 = vadd.f32 %v1734, %v1854
      %v1885 = vadd.f32 %v1735, %v1857
      %v1886 = vadd.f32 %v1736, %v1862
      %v1887 = vadd.f32 %v1737, %v1865
      %v1888 = vadd.f32 %v1738, %v1870
      %v1889 = vadd.f32 %v1739, %v1873
      %v1890 = vadd.f32 %v1740, %v1878
      %v1891 = vadd.f32 %v1741, %v1881
      %s1892 = scalar_lea.vmem [#allocation2], 32
      %v1893 = vld [vmem:[%s1892] sm:$0xff]
      %v1894 = vld [vmem:[%s1892 + $0x10] sm:$0xff]
      %v1895 = vld [vmem:[%s1892 + $0x20] sm:$0xff]
      %v1896 = vld [vmem:[%s1892 + $0x30] sm:$0xff]
      %v1897 = vld [vmem:[%s1892 + $0x40] sm:$0xff]
      %v1898 = vld [vmem:[%s1892 + $0x50] sm:$0xff]
      %v1899 = vld [vmem:[%s1892 + $0x60] sm:$0xff]
      %v1900 = vld [vmem:[%s1892 + $0x70] sm:$0xff]
      %v1901 = vpack.c.bf16 %v1894, %v1893
      %v1902 = vpack.c.bf16 %v1896, %v1895
      %v1903 = vpack.c.bf16 %v1898, %v1897
      %v1904 = vpack.c.bf16 %v1900, %v1899
      %s1905 = scalar_lea.vmem %s2, 384
      %v1906 = vld [vmem:[%s1905] sm:$0xf]
      %v1907 = vld [vmem:[%s1905 + $0x4] sm:$0xf]
      %v1908 = vld [vmem:[%s1905 + $0x8] sm:$0xf]
      %v1909 = vld [vmem:[%s1905 + $0xc] sm:$0xf]
      %v1910 = vld [vmem:[%s1905 + $0x10] sm:$0xf]
      %v1911 = vld [vmem:[%s1905 + $0x14] sm:$0xf]
      %v1912 = vld [vmem:[%s1905 + $0x18] sm:$0xf]
      %v1913 = vld [vmem:[%s1905 + $0x1c] sm:$0xf]
      %v1914 = vld [vmem:[%s1905 + $0x20] sm:$0xf]
      %v1915 = vld [vmem:[%s1905 + $0x24] sm:$0xf]
      %v1916 = vld [vmem:[%s1905 + $0x28] sm:$0xf]
      %v1917 = vld [vmem:[%s1905 + $0x2c] sm:$0xf]
      %v1918 = vld [vmem:[%s1905 + $0x30] sm:$0xf]
      %v1919 = vld [vmem:[%s1905 + $0x34] sm:$0xf]
      %v1920 = vld [vmem:[%s1905 + $0x38] sm:$0xf]
      %v1921 = vld [vmem:[%s1905 + $0x3c] sm:$0xf]
      %v1938 = vunpack.c.l.b16 %v1906
      %v1939 = vunpack.c.l.b16 %v1907
      %v1940 = vunpack.c.l.b16 %v1908
      %v1941 = vunpack.c.l.b16 %v1909
      %v1942 = vunpack.c.l.b16 %v1910
      %v1943 = vunpack.c.l.b16 %v1911
      %v1944 = vunpack.c.l.b16 %v1912
      %v1945 = vunpack.c.l.b16 %v1913
      %v1946 = vunpack.c.l.b16 %v1914
      %v1947 = vunpack.c.l.b16 %v1915
      %v1948 = vunpack.c.l.b16 %v1916
      %v1949 = vunpack.c.l.b16 %v1917
      %v1950 = vunpack.c.l.b16 %v1918
      %v1951 = vunpack.c.l.b16 %v1919
      %v1952 = vunpack.c.l.b16 %v1920
      %v1953 = vunpack.c.l.b16 %v1921
      %v1954 = vpack.c.b16 %v1939, %v1938
      %v1955 = vpack.c.b16 %v1941, %v1940
      %v1956 = vpack.c.b16 %v1943, %v1942
      %v1957 = vpack.c.b16 %v1945, %v1944
      %v1958 = vpack.c.b16 %v1947, %v1946
      %v1959 = vpack.c.b16 %v1949, %v1948
      %v1960 = vpack.c.b16 %v1951, %v1950
      %v1961 = vpack.c.b16 %v1953, %v1952
      %1970 = vmatprep.subr.bf16.mxu0 0
      %1971 = vmatpush1.bf16.msra.mxu0 %v1961
      %1972 = vmatprep.subr.bf16.mxu0 0
      %1973 = vmatpush1.bf16.msra.mxu0 %v1960
      %1974 = vmatprep.subr.bf16.mxu0 0
      %1975 = vmatpush1.bf16.msra.mxu0 %v1959
      %1976 = vmatprep.subr.bf16.mxu0 0
      %1977 = vmatpush1.bf16.msra.mxu0 %v1958
      %1978 = vmatprep.subr.bf16.mxu0 0
      %1979 = vmatpush1.bf16.msra.mxu0 %v1957
      %1980 = vmatprep.subr.bf16.mxu0 0
      %1981 = vmatpush1.bf16.msra.mxu0 %v1956
      %1982 = vmatprep.subr.bf16.mxu0 0
      %1983 = vmatpush1.bf16.msra.mxu0 %v1955
      %1984 = vmatprep.subr.bf16.mxu0 0
      %1985 = vmatpush1.bf16.msra.mxu0 %v1954
      %1986 = vmatprep.subr.bf16.mxu0 0
      %1987 = vmatpush2.bf16.msra.mxu0 0
      %1988 = vmatprep.subr.bf16.mxu0 0
      %1989 = vmatpush2.bf16.msra.mxu0 0
      %1990 = vmatprep.subr.bf16.mxu0 0
      %1991 = vmatpush2.bf16.msra.mxu0 0
      %1992 = vmatprep.subr.bf16.mxu0 0
      %1993 = vmatpush2.bf16.msra.mxu0 0
      %1994 = vmatprep.subr.bf16.mxu0 0
      %1995 = vmatpush2.bf16.msra.mxu0 0
      %1996 = vmatprep.subr.bf16.mxu0 0
      %1997 = vmatpush2.bf16.msra.mxu0 0
      %1998 = vmatprep.subr.bf16.mxu0 0
      %1999 = vmatpush2.bf16.msra.mxu0 0
      %2000 = vmatprep.subr.bf16.mxu0 0
      %2001 = vmatpush2.bf16.msra.mxu0 0
      %2002 = vmatprep.mubr.bf16.mxu0 0
      %2003 = vmatmul.mubr.bf16.gmra.mxu0 %v1901
      %v2004 = vpop.f32.mrf.mxu0
      %v2005 = vadd.f32 0.0, %v2004
      %v2006 = vpop.f32.mrf.mxu0
      %v2007 = vpop.f32.mrf.mxu0
      %v2008 = vadd.f32 0.0, %v2007
      %v2009 = vpop.f32.mrf.mxu0
      %2010 = vmatprep.mubr.bf16.mxu0 0
      %2011 = vmatmul.mubr.bf16.gmra.mxu0 %v1902
      %v2012 = vpop.f32.mrf.mxu0
      %v2013 = vadd.f32 0.0, %v2012
      %v2014 = vpop.f32.mrf.mxu0
      %v2015 = vpop.f32.mrf.mxu0
      %v2016 = vadd.f32 0.0, %v2015
      %v2017 = vpop.f32.mrf.mxu0
      %2018 = vmatprep.mubr.bf16.mxu0 0
      %2019 = vmatmul.mubr.bf16.gmra.mxu0 %v1903
      %v2020 = vpop.f32.mrf.mxu0
      %v2021 = vadd.f32 0.0, %v2020
      %v2022 = vpop.f32.mrf.mxu0
      %v2023 = vpop.f32.mrf.mxu0
      %v2024 = vadd.f32 0.0, %v2023
      %v2025 = vpop.f32.mrf.mxu0
      %2026 = vmatprep.mubr.bf16.mxu0 0
      %2027 = vmatmul.mubr.bf16.gmra.mxu0 %v1904
      %v2028 = vpop.f32.mrf.mxu0
      %v2029 = vadd.f32 0.0, %v2028
      %v2030 = vpop.f32.mrf.mxu0
      %v2031 = vpop.f32.mrf.mxu0
      %v2032 = vadd.f32 0.0, %v2031
      %v2033 = vpop.f32.mrf.mxu0
      %2034 = vdwg.mxu0
      %v2035 = vadd.f32 %v1884, %v2005
      %v2036 = vadd.f32 %v1885, %v2008
      %v2037 = vadd.f32 %v1886, %v2013
      %v2038 = vadd.f32 %v1887, %v2016
      %v2039 = vadd.f32 %v1888, %v2021
      %v2040 = vadd.f32 %v1889, %v2024
      %v2041 = vadd.f32 %v1890, %v2029
      %v2042 = vadd.f32 %v1891, %v2032
      %v2043 = vld [vmem:[%s1892 + $0x1] sm:$0xff]
      %v2044 = vld [vmem:[%s1892 + $0x11] sm:$0xff]
      %v2045 = vld [vmem:[%s1892 + $0x21] sm:$0xff]
      %v2046 = vld [vmem:[%s1892 + $0x31] sm:$0xff]
      %v2047 = vld [vmem:[%s1892 + $0x41] sm:$0xff]
      %v2048 = vld [vmem:[%s1892 + $0x51] sm:$0xff]
      %v2049 = vld [vmem:[%s1892 + $0x61] sm:$0xff]
      %v2050 = vld [vmem:[%s1892 + $0x71] sm:$0xff]
      %v2051 = vpack.c.bf16 %v2044, %v2043
      %v2052 = vpack.c.bf16 %v2046, %v2045
      %v2053 = vpack.c.bf16 %v2048, %v2047
      %v2054 = vpack.c.bf16 %v2050, %v2049
      %s2055 = scalar_lea.vmem %s2, 448
      %v2056 = vld [vmem:[%s2055] sm:$0xf]
      %v2057 = vld [vmem:[%s2055 + $0x4] sm:$0xf]
      %v2058 = vld [vmem:[%s2055 + $0x8] sm:$0xf]
      %v2059 = vld [vmem:[%s2055 + $0xc] sm:$0xf]
      %v2060 = vld [vmem:[%s2055 + $0x10] sm:$0xf]
      %v2061 = vld [vmem:[%s2055 + $0x14] sm:$0xf]
      %v2062 = vld [vmem:[%s2055 + $0x18] sm:$0xf]
      %v2063 = vld [vmem:[%s2055 + $0x1c] sm:$0xf]
      %v2064 = vld [vmem:[%s2055 + $0x20] sm:$0xf]
      %v2065 = vld [vmem:[%s2055 + $0x24] sm:$0xf]
      %v2066 = vld [vmem:[%s2055 + $0x28] sm:$0xf]
      %v2067 = vld [vmem:[%s2055 + $0x2c] sm:$0xf]
      %v2068 = vld [vmem:[%s2055 + $0x30] sm:$0xf]
      %v2069 = vld [vmem:[%s2055 + $0x34] sm:$0xf]
      %v2070 = vld [vmem:[%s2055 + $0x38] sm:$0xf]
      %v2071 = vld [vmem:[%s2055 + $0x3c] sm:$0xf]
      %v2088 = vunpack.c.l.b16 %v2056
      %v2089 = vunpack.c.l.b16 %v2057
      %v2090 = vunpack.c.l.b16 %v2058
      %v2091 = vunpack.c.l.b16 %v2059
      %v2092 = vunpack.c.l.b16 %v2060
      %v2093 = vunpack.c.l.b16 %v2061
      %v2094 = vunpack.c.l.b16 %v2062
      %v2095 = vunpack.c.l.b16 %v2063
      %v2096 = vunpack.c.l.b16 %v2064
      %v2097 = vunpack.c.l.b16 %v2065
      %v2098 = vunpack.c.l.b16 %v2066
      %v2099 = vunpack.c.l.b16 %v2067
      %v2100 = vunpack.c.l.b16 %v2068
      %v2101 = vunpack.c.l.b16 %v2069
      %v2102 = vunpack.c.l.b16 %v2070
      %v2103 = vunpack.c.l.b16 %v2071
      %v2104 = vpack.c.b16 %v2089, %v2088
      %v2105 = vpack.c.b16 %v2091, %v2090
      %v2106 = vpack.c.b16 %v2093, %v2092
      %v2107 = vpack.c.b16 %v2095, %v2094
      %v2108 = vpack.c.b16 %v2097, %v2096
      %v2109 = vpack.c.b16 %v2099, %v2098
      %v2110 = vpack.c.b16 %v2101, %v2100
      %v2111 = vpack.c.b16 %v2103, %v2102
      %2120 = vmatprep.subr.bf16.mxu0 0
      %2121 = vmatpush1.bf16.msra.mxu0 %v2111
      %2122 = vmatprep.subr.bf16.mxu0 0
      %2123 = vmatpush1.bf16.msra.mxu0 %v2110
      %2124 = vmatprep.subr.bf16.mxu0 0
      %2125 = vmatpush1.bf16.msra.mxu0 %v2109
      %2126 = vmatprep.subr.bf16.mxu0 0
      %2127 = vmatpush1.bf16.msra.mxu0 %v2108
      %2128 = vmatprep.subr.bf16.mxu0 0
      %2129 = vmatpush1.bf16.msra.mxu0 %v2107
      %2130 = vmatprep.subr.bf16.mxu0 0
      %2131 = vmatpush1.bf16.msra.mxu0 %v2106
      %2132 = vmatprep.subr.bf16.mxu0 0
      %2133 = vmatpush1.bf16.msra.mxu0 %v2105
      %2134 = vmatprep.subr.bf16.mxu0 0
      %2135 = vmatpush1.bf16.msra.mxu0 %v2104
      %2136 = vmatprep.subr.bf16.mxu0 0
      %2137 = vmatpush2.bf16.msra.mxu0 0
      %2138 = vmatprep.subr.bf16.mxu0 0
      %2139 = vmatpush2.bf16.msra.mxu0 0
      %2140 = vmatprep.subr.bf16.mxu0 0
      %2141 = vmatpush2.bf16.msra.mxu0 0
      %2142 = vmatprep.subr.bf16.mxu0 0
      %2143 = vmatpush2.bf16.msra.mxu0 0
      %2144 = vmatprep.subr.bf16.mxu0 0
      %2145 = vmatpush2.bf16.msra.mxu0 0
      %2146 = vmatprep.subr.bf16.mxu0 0
      %2147 = vmatpush2.bf16.msra.mxu0 0
      %2148 = vmatprep.subr.bf16.mxu0 0
      %2149 = vmatpush2.bf16.msra.mxu0 0
      %2150 = vmatprep.subr.bf16.mxu0 0
      %2151 = vmatpush2.bf16.msra.mxu0 0
      %2152 = vmatprep.mubr.bf16.mxu0 0
      %2153 = vmatmul.mubr.bf16.gmra.mxu0 %v2051
      %v2154 = vpop.f32.mrf.mxu0
      %v2155 = vadd.f32 0.0, %v2154
      %v2156 = vpop.f32.mrf.mxu0
      %v2157 = vpop.f32.mrf.mxu0
      %v2158 = vadd.f32 0.0, %v2157
      %v2159 = vpop.f32.mrf.mxu0
      %2160 = vmatprep.mubr.bf16.mxu0 0
      %2161 = vmatmul.mubr.bf16.gmra.mxu0 %v2052
      %v2162 = vpop.f32.mrf.mxu0
      %v2163 = vadd.f32 0.0, %v2162
      %v2164 = vpop.f32.mrf.mxu0
      %v2165 = vpop.f32.mrf.mxu0
      %v2166 = vadd.f32 0.0, %v2165
      %v2167 = vpop.f32.mrf.mxu0
      %2168 = vmatprep.mubr.bf16.mxu0 0
      %2169 = vmatmul.mubr.bf16.gmra.mxu0 %v2053
      %v2170 = vpop.f32.mrf.mxu0
      %v2171 = vadd.f32 0.0, %v2170
      %v2172 = vpop.f32.mrf.mxu0
      %v2173 = vpop.f32.mrf.mxu0
      %v2174 = vadd.f32 0.0, %v2173
      %v2175 = vpop.f32.mrf.mxu0
      %2176 = vmatprep.mubr.bf16.mxu0 0
      %2177 = vmatmul.mubr.bf16.gmra.mxu0 %v2054
      %v2178 = vpop.f32.mrf.mxu0
      %v2179 = vadd.f32 0.0, %v2178
      %v2180 = vpop.f32.mrf.mxu0
      %v2181 = vpop.f32.mrf.mxu0
      %v2182 = vadd.f32 0.0, %v2181
      %v2183 = vpop.f32.mrf.mxu0
      %2184 = vdwg.mxu0
      %v2185 = vadd.f32 %v2035, %v2155
      %v2186 = vadd.f32 %v2036, %v2158
      %v2187 = vadd.f32 %v2037, %v2163
      %v2188 = vadd.f32 %v2038, %v2166
      %v2189 = vadd.f32 %v2039, %v2171
      %v2190 = vadd.f32 %v2040, %v2174
      %v2191 = vadd.f32 %v2041, %v2179
      %v2192 = vadd.f32 %v2042, %v2182
      %v2193 = vld [vmem:[%s1892 + $0x2] sm:$0xff]
      %v2194 = vld [vmem:[%s1892 + $0x12] sm:$0xff]
      %v2195 = vld [vmem:[%s1892 + $0x22] sm:$0xff]
      %v2196 = vld [vmem:[%s1892 + $0x32] sm:$0xff]
      %v2197 = vld [vmem:[%s1892 + $0x42] sm:$0xff]
      %v2198 = vld [vmem:[%s1892 + $0x52] sm:$0xff]
      %v2199 = vld [vmem:[%s1892 + $0x62] sm:$0xff]
      %v2200 = vld [vmem:[%s1892 + $0x72] sm:$0xff]
      %v2201 = vpack.c.bf16 %v2194, %v2193
      %v2202 = vpack.c.bf16 %v2196, %v2195
      %v2203 = vpack.c.bf16 %v2198, %v2197
      %v2204 = vpack.c.bf16 %v2200, %v2199
      %s2205 = scalar_lea.vmem %s2, 512
      %v2206 = vld [vmem:[%s2205] sm:$0xf]
      %v2207 = vld [vmem:[%s2205 + $0x4] sm:$0xf]
      %v2208 = vld [vmem:[%s2205 + $0x8] sm:$0xf]
      %v2209 = vld [vmem:[%s2205 + $0xc] sm:$0xf]
      %v2210 = vld [vmem:[%s2205 + $0x10] sm:$0xf]
      %v2211 = vld [vmem:[%s2205 + $0x14] sm:$0xf]
      %v2212 = vld [vmem:[%s2205 + $0x18] sm:$0xf]
      %v2213 = vld [vmem:[%s2205 + $0x1c] sm:$0xf]
      %v2214 = vld [vmem:[%s2205 + $0x20] sm:$0xf]
      %v2215 = vld [vmem:[%s2205 + $0x24] sm:$0xf]
      %v2216 = vld [vmem:[%s2205 + $0x28] sm:$0xf]
      %v2217 = vld [vmem:[%s2205 + $0x2c] sm:$0xf]
      %v2218 = vld [vmem:[%s2205 + $0x30] sm:$0xf]
      %v2219 = vld [vmem:[%s2205 + $0x34] sm:$0xf]
      %v2220 = vld [vmem:[%s2205 + $0x38] sm:$0xf]
      %v2221 = vld [vmem:[%s2205 + $0x3c] sm:$0xf]
      %v2238 = vunpack.c.l.b16 %v2206
      %v2239 = vunpack.c.l.b16 %v2207
      %v2240 = vunpack.c.l.b16 %v2208
      %v2241 = vunpack.c.l.b16 %v2209
      %v2242 = vunpack.c.l.b16 %v2210
      %v2243 = vunpack.c.l.b16 %v2211
      %v2244 = vunpack.c.l.b16 %v2212
      %v2245 = vunpack.c.l.b16 %v2213
      %v2246 = vunpack.c.l.b16 %v2214
      %v2247 = vunpack.c.l.b16 %v2215
      %v2248 = vunpack.c.l.b16 %v2216
      %v2249 = vunpack.c.l.b16 %v2217
      %v2250 = vunpack.c.l.b16 %v2218
      %v2251 = vunpack.c.l.b16 %v2219
      %v2252 = vunpack.c.l.b16 %v2220
      %v2253 = vunpack.c.l.b16 %v2221
      %v2254 = vpack.c.b16 %v2239, %v2238
      %v2255 = vpack.c.b16 %v2241, %v2240
      %v2256 = vpack.c.b16 %v2243, %v2242
      %v2257 = vpack.c.b16 %v2245, %v2244
      %v2258 = vpack.c.b16 %v2247, %v2246
      %v2259 = vpack.c.b16 %v2249, %v2248
      %v2260 = vpack.c.b16 %v2251, %v2250
      %v2261 = vpack.c.b16 %v2253, %v2252
      %2270 = vmatprep.subr.bf16.mxu0 0
      %2271 = vmatpush1.bf16.msra.mxu0 %v2261
      %2272 = vmatprep.subr.bf16.mxu0 0
      %2273 = vmatpush1.bf16.msra.mxu0 %v2260
      %2274 = vmatprep.subr.bf16.mxu0 0
      %2275 = vmatpush1.bf16.msra.mxu0 %v2259
      %2276 = vmatprep.subr.bf16.mxu0 0
      %2277 = vmatpush1.bf16.msra.mxu0 %v2258
      %2278 = vmatprep.subr.bf16.mxu0 0
      %2279 = vmatpush1.bf16.msra.mxu0 %v2257
      %2280 = vmatprep.subr.bf16.mxu0 0
      %2281 = vmatpush1.bf16.msra.mxu0 %v2256
      %2282 = vmatprep.subr.bf16.mxu0 0
      %2283 = vmatpush1.bf16.msra.mxu0 %v2255
      %2284 = vmatprep.subr.bf16.mxu0 0
      %2285 = vmatpush1.bf16.msra.mxu0 %v2254
      %2286 = vmatprep.subr.bf16.mxu0 0
      %2287 = vmatpush2.bf16.msra.mxu0 0
      %2288 = vmatprep.subr.bf16.mxu0 0
      %2289 = vmatpush2.bf16.msra.mxu0 0
      %2290 = vmatprep.subr.bf16.mxu0 0
      %2291 = vmatpush2.bf16.msra.mxu0 0
      %2292 = vmatprep.subr.bf16.mxu0 0
      %2293 = vmatpush2.bf16.msra.mxu0 0
      %2294 = vmatprep.subr.bf16.mxu0 0
      %2295 = vmatpush2.bf16.msra.mxu0 0
      %2296 = vmatprep.subr.bf16.mxu0 0
      %2297 = vmatpush2.bf16.msra.mxu0 0
      %2298 = vmatprep.subr.bf16.mxu0 0
      %2299 = vmatpush2.bf16.msra.mxu0 0
      %2300 = vmatprep.subr.bf16.mxu0 0
      %2301 = vmatpush2.bf16.msra.mxu0 0
      %2302 = vmatprep.mubr.bf16.mxu0 0
      %2303 = vmatmul.mubr.bf16.gmra.mxu0 %v2201
      %v2304 = vpop.f32.mrf.mxu0
      %v2305 = vadd.f32 0.0, %v2304
      %v2306 = vpop.f32.mrf.mxu0
      %v2307 = vpop.f32.mrf.mxu0
      %v2308 = vadd.f32 0.0, %v2307
      %v2309 = vpop.f32.mrf.mxu0
      %2310 = vmatprep.mubr.bf16.mxu0 0
      %2311 = vmatmul.mubr.bf16.gmra.mxu0 %v2202
      %v2312 = vpop.f32.mrf.mxu0
      %v2313 = vadd.f32 0.0, %v2312
      %v2314 = vpop.f32.mrf.mxu0
      %v2315 = vpop.f32.mrf.mxu0
      %v2316 = vadd.f32 0.0, %v2315
      %v2317 = vpop.f32.mrf.mxu0
      %2318 = vmatprep.mubr.bf16.mxu0 0
      %2319 = vmatmul.mubr.bf16.gmra.mxu0 %v2203
      %v2320 = vpop.f32.mrf.mxu0
      %v2321 = vadd.f32 0.0, %v2320
      %v2322 = vpop.f32.mrf.mxu0
      %v2323 = vpop.f32.mrf.mxu0
      %v2324 = vadd.f32 0.0, %v2323
      %v2325 = vpop.f32.mrf.mxu0
      %2326 = vmatprep.mubr.bf16.mxu0 0
      %2327 = vmatmul.mubr.bf16.gmra.mxu0 %v2204
      %v2328 = vpop.f32.mrf.mxu0
      %v2329 = vadd.f32 0.0, %v2328
      %v2330 = vpop.f32.mrf.mxu0
      %v2331 = vpop.f32.mrf.mxu0
      %v2332 = vadd.f32 0.0, %v2331
      %v2333 = vpop.f32.mrf.mxu0
      %2334 = vdwg.mxu0
      %v2335 = vadd.f32 %v2185, %v2305
      %v2336 = vadd.f32 %v2186, %v2308
      %v2337 = vadd.f32 %v2187, %v2313
      %v2338 = vadd.f32 %v2188, %v2316
      %v2339 = vadd.f32 %v2189, %v2321
      %v2340 = vadd.f32 %v2190, %v2324
      %v2341 = vadd.f32 %v2191, %v2329
      %v2342 = vadd.f32 %v2192, %v2332
      %v2343 = vld [vmem:[%s4 + $0x1] sm:$0x1]
      %v2344 = vlaneseq
      %v2345 = vshrl.u32 %v2344, 7
      %v2346 = vsub.s32 0, %v2345
      %v2347 = vrot.slane %v2343, %v2346
      %v2348 = vmul.f32 %v2335, %v2347
      %v2349 = vmul.f32 %v2336, %v2347
      %v2350 = vmul.f32 %v2337, %v2347
      %v2351 = vmul.f32 %v2338, %v2347
      %v2352 = vmul.f32 %v2339, %v2347
      %v2353 = vmul.f32 %v2340, %v2347
      %v2354 = vmul.f32 %v2341, %v2347
      %v2355 = vmul.f32 %v2342, %v2347
      %v2356 = vld [vmem:[%s5 + $0x1] sm:$0x1]
      %v2357 = vlaneseq
      %v2358 = vshrl.u32 %v2357, 7
      %v2359 = vsub.s32 0, %v2358
      %v2360 = vrot.slane %v2356, %v2359
      %v2361 = vadd.f32 %v2348, %v2360
      %v2362 = vadd.f32 %v2349, %v2360
      %v2363 = vadd.f32 %v2350, %v2360
      %v2364 = vadd.f32 %v2351, %v2360
      %v2365 = vadd.f32 %v2352, %v2360
      %v2366 = vadd.f32 %v2353, %v2360
      %v2367 = vadd.f32 %v2354, %v2360
      %v2368 = vadd.f32 %v2355, %v2360
      %v2369 = vld [vmem:[%s3] sm:$0xf]
      %v2370 = vld [vmem:[%s3 + $0x4] sm:$0xf]
      %v2373 = vunpack.c.l.b16 %v2369
      %v2374 = vunpack.c.l.b16 %v2370
      %v2375 = vpack.c.b16 %v2374, %v2373
      %2377 = vmatprep.subr.bf16.mxu0 0
      %2378 = vmatpush1.bf16.msra.mxu0 0
      %2379 = vmatprep.subr.bf16.mxu0 0
      %2380 = vmatpush1.bf16.msra.mxu0 0
      %2381 = vmatprep.subr.bf16.mxu0 0
      %2382 = vmatpush1.bf16.msra.mxu0 0
      %2383 = vmatprep.subr.bf16.mxu0 0
      %2384 = vmatpush1.bf16.msra.mxu0 0
      %2385 = vmatprep.subr.bf16.mxu0 0
      %2386 = vmatpush1.bf16.msra.mxu0 0
      %2387 = vmatprep.subr.bf16.mxu0 0
      %2388 = vmatpush1.bf16.msra.mxu0 0
      %2389 = vmatprep.subr.bf16.mxu0 0
      %2390 = vmatpush1.bf16.msra.mxu0 0
      %2391 = vmatprep.subr.bf16.mxu0 0
      %2392 = vmatpush1.bf16.msra.mxu0 %v2375
      %2393 = vmatprep.subr.bf16.mxu0 0
      %2394 = vmatpush2.bf16.msra.mxu0 0
      %2395 = vmatprep.subr.bf16.mxu0 0
      %2396 = vmatpush2.bf16.msra.mxu0 0
      %2397 = vmatprep.subr.bf16.mxu0 0
      %2398 = vmatpush2.bf16.msra.mxu0 0
      %2399 = vmatprep.subr.bf16.mxu0 0
      %2400 = vmatpush2.bf16.msra.mxu0 0
      %2401 = vmatprep.subr.bf16.mxu0 0
      %2402 = vmatpush2.bf16.msra.mxu0 0
      %2403 = vmatprep.subr.bf16.mxu0 0
      %2404 = vmatpush2.bf16.msra.mxu0 0
      %2405 = vmatprep.subr.bf16.mxu0 0
      %2406 = vmatpush2.bf16.msra.mxu0 0
      %2407 = vmatprep.subr.bf16.mxu0 0
      %2408 = vmatpush2.bf16.msra.mxu0 0
      %2409 = vmatprep.mubr.bf16.mxu0 0
      %2410 = vmatmul.mubr.bf16.gmra.mxu0 %v512
      %v2411 = vpop.f32.mrf.mxu0
      %v2412 = vadd.f32 0.0, %v2411
      %v2413 = vpop.f32.mrf.mxu0
      %v2414 = vpop.f32.mrf.mxu0
      %v2415 = vadd.f32 0.0, %v2414
      %v2416 = vpop.f32.mrf.mxu0
      %2417 = vmatprep.mubr.bf16.mxu0 0
      %2418 = vmatmul.mubr.bf16.gmra.mxu0 %v515
      %v2419 = vpop.f32.mrf.mxu0
      %v2420 = vadd.f32 0.0, %v2419
      %v2421 = vpop.f32.mrf.mxu0
      %v2422 = vpop.f32.mrf.mxu0
      %v2423 = vadd.f32 0.0, %v2422
      %v2424 = vpop.f32.mrf.mxu0
      %2425 = vmatprep.mubr.bf16.mxu0 0
      %2426 = vmatmul.mubr.bf16.gmra.mxu0 %v518
      %v2427 = vpop.f32.mrf.mxu0
      %v2428 = vadd.f32 0.0, %v2427
      %v2429 = vpop.f32.mrf.mxu0
      %v2430 = vpop.f32.mrf.mxu0
      %v2431 = vadd.f32 0.0, %v2430
      %v2432 = vpop.f32.mrf.mxu0
      %2433 = vmatprep.mubr.bf16.mxu0 0
      %2434 = vmatmul.mubr.bf16.gmra.mxu0 %v521
      %v2435 = vpop.f32.mrf.mxu0
      %v2436 = vadd.f32 0.0, %v2435
      %v2437 = vpop.f32.mrf.mxu0
      %v2438 = vpop.f32.mrf.mxu0
      %v2439 = vadd.f32 0.0, %v2438
      %v2440 = vpop.f32.mrf.mxu0
      %2441 = vdwg.mxu0
      %v2442 = vld [vmem:[%s4 + $0x2] sm:$0x1]
      %v2443 = vlaneseq
      %v2444 = vshrl.u32 %v2443, 7
      %v2445 = vsub.s32 0, %v2444
      %v2446 = vrot.slane %v2442, %v2445
      %v2447 = vmul.f32 %v2412, %v2446
      %v2448 = vmul.f32 %v2415, %v2446
      %v2449 = vmul.f32 %v2420, %v2446
      %v2450 = vmul.f32 %v2423, %v2446
      %v2451 = vmul.f32 %v2428, %v2446
      %v2452 = vmul.f32 %v2431, %v2446
      %v2453 = vmul.f32 %v2436, %v2446
      %v2454 = vmul.f32 %v2439, %v2446
      %v2455 = vld [vmem:[%s5 + $0x2] sm:$0x1]
      %v2456 = vlaneseq
      %v2457 = vshrl.u32 %v2456, 7
      %v2458 = vsub.s32 0, %v2457
      %v2459 = vrot.slane %v2455, %v2458
      %v2460 = vadd.f32 %v2447, %v2459
      %v2461 = vadd.f32 %v2448, %v2459
      %v2462 = vadd.f32 %v2449, %v2459
      %v2463 = vadd.f32 %v2450, %v2459
      %v2464 = vadd.f32 %v2451, %v2459
      %v2465 = vadd.f32 %v2452, %v2459
      %v2466 = vadd.f32 %v2453, %v2459
      %v2467 = vadd.f32 %v2454, %v2459
      %v2468 = vadd.f32 %v2361, %v2460
      %v2469 = vadd.f32 %v2362, %v2461
      %v2470 = vadd.f32 %v2363, %v2462
      %v2471 = vadd.f32 %v2364, %v2463
      %v2472 = vadd.f32 %v2365, %v2464
      %v2473 = vadd.f32 %v2366, %v2465
      %v2474 = vadd.f32 %v2367, %v2466
      %v2475 = vadd.f32 %v2368, %v2467
      %v2476 = vmax.f32 %v2468, 0.0
      %v2477 = vmax.f32 %v2469, 0.0
      %v2478 = vmax.f32 %v2470, 0.0
      %v2479 = vmax.f32 %v2471, 0.0
      %v2480 = vmax.f32 %v2472, 0.0
      %v2481 = vmax.f32 %v2473, 0.0
      %v2482 = vmax.f32 %v2474, 0.0
      %v2483 = vmax.f32 %v2475, 0.0
      %v2484 = vpack.c.bf16 %v2477, %v2476
      %v2485 = vpack.c.bf16 %v2479, %v2478
      %v2486 = vpack.c.bf16 %v2481, %v2480
      %v2487 = vpack.c.bf16 %v2483, %v2482
      %v2492 = vunpack.c.l.b16 %v2484
      %v2493 = vunpack.c.h.b16 %v2484
      %v2494 = vunpack.c.l.b16 %v2485
      %v2495 = vunpack.c.h.b16 %v2485
      %v2496 = vunpack.c.l.b16 %v2486
      %v2497 = vunpack.c.h.b16 %v2486
      %v2498 = vunpack.c.l.b16 %v2487
      %v2499 = vunpack.c.h.b16 %v2487
      %v2500 = vpack.c.b16 %v2492, %v2492
      %v2501 = vpack.c.b16 %v2493, %v2493
      %v2502 = vpack.c.b16 %v2494, %v2494
      %v2503 = vpack.c.b16 %v2495, %v2495
      %v2504 = vpack.c.b16 %v2496, %v2496
      %v2505 = vpack.c.b16 %v2497, %v2497
      %v2506 = vpack.c.b16 %v2498, %v2498
      %v2507 = vpack.c.b16 %v2499, %v2499
      %2516 = vst [vmem:[%s251] sm:$0xf] %v2500
      %2517 = vst [vmem:[%s251 + $0x4] sm:$0xf] %v2501
      %2518 = vst [vmem:[%s251 + $0x8] sm:$0xf] %v2502
      %2519 = vst [vmem:[%s251 + $0xc] sm:$0xf] %v2503
      %2520 = vst [vmem:[%s251 + $0x10] sm:$0xf] %v2504
      %2521 = vst [vmem:[%s251 + $0x14] sm:$0xf] %v2505
      %2522 = vst [vmem:[%s251 + $0x18] sm:$0xf] %v2506
      %2523 = vst [vmem:[%s251 + $0x1c] sm:$0xf] %v2507
      %p2524 = scmp.lt.s32.totalorder %s17, 1
      %s2525 = scalar_select %p2524, %s17, 1
      %s2526 = smul.addr %s2525, 8
      %s2527 = smul.addr %s2526, 4
      %s2528 = scalar_lea.vmem %s6, %s2527
      // Predicated region
      $region45: #{basic_block_forward.1} parent=43 // pred_check
        %p2529 = pneg %p166
      $region46: #{basic_block_forward.1} parent=43 // pred_check_branch
        %2531 = sbr.rel (%p2529) target = $region48
      $region47: #{basic_block_forward.1} parent=43 // pred_region
        _
      $region48: #{basic_block_forward.1} parent=43 // pred_fallthru
        _
    $region44: #{basic_block_forward.1} parent=5 // pred_fallthru
      _
    %p2532 = scmp.le.s32.totalorder 2, %s12
    // Predicated region
    $region49: #{basic_block_forward.1} parent=5 // pred_check
      %p2533 = pneg %p2532
    $region50: #{basic_block_forward.1} parent=5 // pred_check_branch
      %2535 = sbr.rel (%p2533) target = $region52
    $region51: #{basic_block_forward.1} parent=5 // pred_region
      %s2536 = ssub.s32 %s12, 2
      // Predicated region
      $region53: #{basic_block_forward.1} parent=51 // pred_check
        %p2537 = pneg %p172
      $region54: #{basic_block_forward.1} parent=51 // pred_check_branch
        %2539 = sbr.rel (%p2537) target = $region56
      $region55: #{basic_block_forward.1} parent=51 // pred_region
        %p2540 = scmp.lt.s32.totalorder %s18, 1
        %s2541 = scalar_select %p2540, %s18, 1
        %s2542 = smul.addr %s2541, 8
        %s2543 = smul.addr %s2542, 4
        %s2544 = scalar_lea.vmem %s6, %s2543
      $region56: #{basic_block_forward.1} parent=51 // pred_fallthru
        _
    $region52: #{basic_block_forward.1} parent=5 // pred_fallthru
      _
  $region6: #{basic_block_forward.1} parent=0 // loop_footer
    %s16 = sadd.s32 1, %s12
  $region7: #{basic_block_forward.1} parent=0 // loop_footer_branch
    %11 = sbr.rel target = $region3
  $region8: #{basic_block_forward.1} parent=0 // loop_exit
    _

</llo_original>
